<compile_context>
chip_gen: v7x
topology: tpu7x:2x2x1
jax: 0.10.0
libtpu: 0.0.40
codegen_flags: <defaults>
</compile_context>

<pallas_src>
import functools

import jax
import jax.numpy as jnp
from jax.experimental import pallas as pl
from jax.experimental.pallas import tpu as pltpu

NEG_BIG = float(-jnp.finfo(jnp.float32).max)  # matches -torch.finfo(f32).max


def gat_layer_kernel(x_ref, adjb_ref, w_ref, a_ref, o_ref, *, alpha, n_heads,
                     f_out):
    """All heads of one GraphAttentionLayer for one batch element, fused.

    x_ref   : (1, N, F_in)     node features (bf16)
    adjb_ref: (N, N)           additive adjacency bias (0 / -f32max), f32
    w_ref   : (F_in, H*F_out)  head-stacked projection (bf16)
    a_ref   : (H*F_out, 2*H)   block-diag attention vectors [A1 | A2], f32
    o_ref   : (1, N, H*F_out)  concatenated head outputs (f32), lane-dense
    """
    x = x_ref[0]                                                  # (N, F_in)

    # One projection matmul for all heads (bf16 MXU, f32 accumulation).
    wh = jnp.dot(x, w_ref[...], preferred_element_type=jnp.float32)   # (N, H*F)

    # All per-head attention-vector contractions in one matmul:
    #   s[:, h] = Wh_h @ a1_h ,   s[:, H + h] = Wh_h @ a2_h
    s = jnp.dot(wh, a_ref[...], preferred_element_type=jnp.float32)   # (N, 2H)
    s1_all = s[:, :n_heads]                                       # (N, H)
    s2_t = s[:, n_heads:].T                                       # (H, N)

    adjb = adjb_ref[...]                                          # (N, N)
    wh_bf = wh.astype(jnp.bfloat16)

    outs = []
    for h in range(n_heads):                 # static unroll, H is small
        e = s1_all[:, h:h + 1] + s2_t[h:h + 1, :]                 # (N, N)
        e = jnp.where(e > 0, e, alpha * e)                        # LeakyReLU
        e = e + adjb                                              # mask non-edges
        m = jnp.max(e, axis=-1, keepdims=True)
        p = jnp.exp(e - m)
        att = p * pl.reciprocal(jnp.sum(p, axis=-1, keepdims=True), approx=True)
        # TODO(synk): attention dropout omitted (inference / training=False).

        # Weighted aggregation (bf16 MXU, f32 accumulation) + ELU.  concat=True
        # heads apply ELU inside the layer; the concat=False output layer has
        # F.elu applied right after it in GAT.forward, so ELU-in-kernel is
        # equivalent in both cases.
        hp = jnp.dot(att.astype(jnp.bfloat16),
                     wh_bf[:, h * f_out:(h + 1) * f_out],
                     preferred_element_type=jnp.float32)          # (N, F_out)
        outs.append(jnp.where(hp > 0, hp, jnp.exp(jnp.minimum(hp, 0.0)) - 1.0))

    # Single lane-dense store of the head-concatenated slab.
    o_ref[0] = jnp.concatenate(outs, axis=-1).astype(o_ref.dtype)


def gat_attention_layer(x_bf, adj_bias, w_bf, a_blk, *, alpha, n_heads, f_out):
    """x_bf: (BC, N, F_in) bf16; adj_bias: (N, N) f32;
    w_bf: (F_in, H*F_out) bf16; a_blk: (H*F_out, 2H) f32.
    Returns (BC, N, H*F_out) f32 with ELU applied (see kernel comment)."""
    BC, N, f_in = x_bf.shape
    hf = n_heads * f_out
    kernel = functools.partial(gat_layer_kernel, alpha=alpha, n_heads=n_heads,
                               f_out=f_out)
    return pl.pallas_call(
        kernel,
        out_shape=jax.ShapeDtypeStruct((BC, N, hf), jnp.float32),
        grid_spec=pltpu.PrefetchScalarGridSpec(
            num_scalar_prefetch=0,
            grid=(BC,),
            in_specs=[
                pl.BlockSpec((1, N, f_in), lambda b: (b, 0, 0)),     # x
                pl.BlockSpec((N, N), lambda b: (0, 0)),              # adj bias
                pl.BlockSpec((f_in, hf), lambda b: (0, 0)),          # W stacked
                pl.BlockSpec((hf, 2 * n_heads), lambda b: (0, 0)),   # a block-diag
            ],
            out_specs=pl.BlockSpec((1, N, hf), lambda b: (b, 0, 0)),
        ),
        compiler_params=pltpu.CompilerParams(
            dimension_semantics=("parallel",)),
    )(x_bf, adj_bias, w_bf, a_blk)


def _stack_head_params(w_heads, a_heads):
    """w_heads: (H, F_in, F_out); a_heads: (H, 2*F_out).

    Returns W stacked along features (F_in, H*F_out) and a block-diagonal
    attention matrix (H*F_out, 2H) whose columns give, per head, <Wh_h, a1_h>
    and <Wh_h, a2_h> when right-multiplied onto the stacked Wh.
    """
    H, f_in, f_out = w_heads.shape
    w_stack = jnp.transpose(w_heads, (1, 0, 2)).reshape(f_in, H * f_out)
    a1 = a_heads[:, :f_out]                    # (H, F_out)
    a2 = a_heads[:, f_out:]                    # (H, F_out)
    eye = jnp.eye(H, dtype=jnp.float32)
    a1_blk = (a1[:, :, None] * eye[:, None, :]).reshape(H * f_out, H)
    a2_blk = (a2[:, :, None] * eye[:, None, :]).reshape(H * f_out, H)
    return w_stack, jnp.concatenate([a1_blk, a2_blk], axis=1).astype(jnp.float32)


def gat_forward(x, adj, w_heads, a_heads, w_out, a_out, *, alpha):
    """Inference forward of the PyTorch GAT (order=1).

    x: (B, C, N, F_in); adj: (N, N)
    w_heads: (H, F_in, F_out); a_heads: (H, 2*F_out)
    w_out:   (H*F_out, F_out); a_out:   (2*F_out,)
    Returns (B, C, N, F_out).
    """
    B, C, N, f_in = x.shape
    H, _, f_out = w_heads.shape
    xb = x.reshape(B * C, N, f_in)
    # TODO(synk): input feature dropout omitted (inference / training=False).

    # Additive adjacency bias, shared by both layers (kept f32: -f32max).
    adj_bias = jnp.where(adj > 0, 0.0, NEG_BIG).astype(jnp.float32)

    # Multi-head layer (concat=True): one fused grid step per batch element.
    w1, a1 = _stack_head_params(w_heads, a_heads)
    h1 = gat_attention_layer(xb.astype(jnp.bfloat16), adj_bias,
                             w1.astype(jnp.bfloat16), a1,
                             alpha=alpha, n_heads=H, f_out=f_out)  # (BC, N, H*F)

    # Output attention layer (concat=False) + the trailing F.elu in GAT.forward.
    w2, a2 = _stack_head_params(w_out[None], a_out[None])
    h2 = gat_attention_layer(h1.astype(jnp.bfloat16), adj_bias,
                             w2.astype(jnp.bfloat16), a2,
                             alpha=alpha, n_heads=1, f_out=f_out)  # (BC, N, F)
    return h2.reshape(B, C, N, f_out)


# ---------------------------------------------------------------------------
# Pure-JAX reference mirroring the PyTorch module (eval mode), with matmul
# operands in bf16 / f32 accumulation to match the kernel's MXU precision.
# ---------------------------------------------------------------------------
def _gal_ref(h, adj, w, a, alpha, concat):
    f_out = w.shape[1]
    wh = jnp.dot(h.astype(jnp.bfloat16), w.astype(jnp.bfloat16),
                 preferred_element_type=jnp.float32)          # (BC, N, F_out)
    wh1 = wh @ a[:f_out]                                      # (BC, N)
    wh2 = wh @ a[f_out:]                                      # (BC, N)
    e = wh1[..., :, None] + wh2[..., None, :]                 # (BC, N, N)
    e = jnp.where(e > 0, e, alpha * e)
    e = jnp.where(adj > 0, e, NEG_BIG)
    att = jax.nn.softmax(e, axis=-1)
    hp = jnp.einsum('bij,bjf->bif', att.astype(jnp.bfloat16),
                    wh.astype(jnp.bfloat16),
                    preferred_element_type=jnp.float32)
    return jax.nn.elu(hp) if concat else hp


def gat_ref(x, adj, w_heads, a_heads, w_out, a_out, alpha):
    B, C, N, f_in = x.shape
    H, _, f_out = w_heads.shape
    xb = x.reshape(B * C, N, f_in)
    heads = [_gal_ref(xb, adj, w_heads[h], a_heads[h], alpha, True)
             for h in range(H)]
    cat = jnp.concatenate(heads, axis=-1)
    out = jax.nn.elu(_gal_ref(cat, adj, w_out, a_out, alpha, False))
    return out.reshape(B, C, N, f_out)


if __name__ == "__main__":
    B, C, N = 2, 2, 8          # batch, extra (e.g. time) dim, graph nodes
    F_IN, F_OUT, HEADS = 16, 16, 4
    ALPHA = 0.1

    key = jax.random.PRNGKey(0)
    kx, kadj, kw, ka, kwo, kao = jax.random.split(key, 6)

    x = jax.random.normal(kx, (B, C, N, F_IN), dtype=jnp.float32)
    # Random 0/1 adjacency with self-loops, shared across batch and heads.
    adj = (jax.random.uniform(kadj, (N, N)) > 0.5).astype(jnp.float32)
    adj = jnp.maximum(adj, jnp.eye(N, dtype=jnp.float32))

    # Deterministic xavier-uniform-style init (gain folded into the bound).
    def xavier(k, shape, gain=1.414):
        fan_in, fan_out = shape[-2], shape[-1]
        bound = gain * (6.0 / (fan_in + fan_out)) ** 0.5
        return jax.random.uniform(k, shape, minval=-bound, maxval=bound,
                                  dtype=jnp.float32)

    w_heads = xavier(kw, (HEADS, F_IN, F_OUT))                 # per-head W
    a_heads = xavier(ka, (HEADS, 2 * F_OUT, 1))[..., 0]        # per-head a
    w_out = xavier(kwo, (HEADS * F_OUT, F_OUT))                # out_att W
    a_out = xavier(kao, (2 * F_OUT, 1))[..., 0]                # out_att a

    fwd = jax.jit(functools.partial(gat_forward, alpha=ALPHA))
    out = jax.block_until_ready(fwd(x, adj, w_heads, a_heads, w_out, a_out))

    ref = gat_ref(x, adj, w_heads, a_heads, w_out, a_out, ALPHA)
    assert out.shape == (B, C, N, F_OUT), out.shape
    # bf16 matmuls + approx reciprocal: compare against the bf16-matmul
    # reference at a 1e-2 tolerance (observed error is ~1e-3).
    max_err = float(jnp.max(jnp.abs(out - ref)))
    assert jnp.allclose(out, ref, atol=1e-2, rtol=1e-2), (
        f"mismatch vs reference, max abs err = {max_err}")

    print("KERNEL_OK")
</pallas_src>

<mosaic_0001>
module attributes {stable_mosaic.version = 11 : i64} {
  func.func @gat_layer_kernel(%arg0: i32, %arg1: memref<1x8x64xbf16, #tpu.memory_space<vmem>>, %arg2: memref<8x8xf32, #tpu.memory_space<vmem>>, %arg3: memref<64x16xbf16, #tpu.memory_space<vmem>>, %arg4: memref<16x2xf32, #tpu.memory_space<vmem>>, %arg5: memref<1x8x16xf32, #tpu.memory_space<vmem>>) attributes {dimension_semantics = [#tpu.dimension_semantics<parallel>], iteration_bounds = array<i64: 4>, scalar_prefetch = 0 : i64, scratch_operands = 0 : i64, tpu.core_type = #tpu.core_type<tc>, window_params = [{transform_indices = @transform_0, window_bounds = array<i64: 1, 8, 64>}, {pipeline_mode = #tpu.pipeline_mode<synchronous>, transform_indices = @transform_1, window_bounds = array<i64: 8, 8>}, {pipeline_mode = #tpu.pipeline_mode<synchronous>, transform_indices = @transform_2, window_bounds = array<i64: 64, 16>}, {pipeline_mode = #tpu.pipeline_mode<synchronous>, transform_indices = @transform_3, window_bounds = array<i64: 16, 2>}, {transform_indices = @transform_4, window_bounds = array<i64: 1, 8, 16>}]} {
    %c0 = arith.constant 0 : index
    %c0_0 = arith.constant 0 : index
    %c0_1 = arith.constant 0 : index
    %0 = vector.load %arg1[%c0, %c0_0, %c0_1] : memref<1x8x64xbf16, #tpu.memory_space<vmem>>, vector<1x8x64xbf16>
    %1 = vector.shape_cast %0 : vector<1x8x64xbf16> to vector<8x64xbf16>
    %c0_2 = arith.constant 0 : index
    %c0_3 = arith.constant 0 : index
    %2 = vector.load %arg3[%c0_2, %c0_3] : memref<64x16xbf16, #tpu.memory_space<vmem>>, vector<64x16xbf16>
    %cst = arith.constant dense<0.000000e+00> : vector<8x16xf32>
    %3 = tpu.matmul %1, %2, %cst {dimension_numbers = #tpu.dot_dimension_numbers<[1], [0], [0], [1], [0, 0, 1, 1], [], []>} : vector<8x64xbf16>, vector<64x16xbf16>, vector<8x16xf32> -> vector<8x16xf32>
    %c0_4 = arith.constant 0 : index
    %c0_5 = arith.constant 0 : index
    %4 = vector.load %arg4[%c0_4, %c0_5] : memref<16x2xf32, #tpu.memory_space<vmem>>, vector<16x2xf32>
    %cst_6 = arith.constant dense<0.000000e+00> : vector<8x2xf32>
    %5 = tpu.matmul %3, %4, %cst_6 {dimension_numbers = #tpu.dot_dimension_numbers<[1], [0], [0], [1], [0, 0, 1, 1], [], []>} : vector<8x16xf32>, vector<16x2xf32>, vector<8x2xf32> -> vector<8x2xf32>
    %6 = vector.extract_strided_slice %5 {offsets = [0, 0], sizes = [8, 1], strides = [1, 1]} : vector<8x2xf32> to vector<8x1xf32>
    %7 = vector.extract_strided_slice %5 {offsets = [0, 1], sizes = [8, 1], strides = [1, 1]} : vector<8x2xf32> to vector<8x1xf32>
    %8 = tpu.transpose %7, [1, 0] : vector<8x1xf32> -> vector<1x8xf32>
    %c0_7 = arith.constant 0 : index
    %c0_8 = arith.constant 0 : index
    %9 = vector.load %arg2[%c0_7, %c0_8] : memref<8x8xf32, #tpu.memory_space<vmem>>, vector<8x8xf32>
    %10 = arith.truncf %3 : vector<8x16xf32> to vector<8x16xbf16>
    %11 = vector.broadcast %6 : vector<8x1xf32> to vector<8x8xf32>
    %12 = vector.broadcast %8 : vector<1x8xf32> to vector<8x8xf32>
    %13 = arith.addf %11, %12 : vector<8x8xf32>
    %cst_9 = arith.constant 0.000000e+00 : f32
    %14 = vector.broadcast %cst_9 : f32 to vector<8x8xf32>
    %15 = arith.cmpf ogt, %13, %14 : vector<8x8xf32>
    %cst_10 = arith.constant 1.000000e-01 : f32
    %16 = vector.broadcast %cst_10 : f32 to vector<8x8xf32>
    %17 = arith.mulf %16, %13 : vector<8x8xf32>
    %18 = arith.select %15, %13, %17 : vector<8x8xi1>, vector<8x8xf32>
    %19 = arith.addf %18, %9 : vector<8x8xf32>
    %cst_11 = arith.constant dense<0xFF800000> : vector<8xf32>
    %20 = vector.multi_reduction <maximumf>, %19, %cst_11 [1] : vector<8x8xf32> to vector<8xf32>
    %21 = vector.shape_cast %20 : vector<8xf32> to vector<8x1xf32>
    %22 = vector.broadcast %21 : vector<8x1xf32> to vector<8x8xf32>
    %23 = arith.subf %19, %22 : vector<8x8xf32>
    %24 = math.exp %23 : vector<8x8xf32>
    %cst_12 = arith.constant dense<0.000000e+00> : vector<8xf32>
    %25 = vector.multi_reduction <add>, %24, %cst_12 [1] : vector<8x8xf32> to vector<8xf32>
    %26 = vector.shape_cast %25 : vector<8xf32> to vector<8x1xf32>
    %27 = tpu.reciprocal %26 {approx = true} : vector<8x1xf32> -> vector<8x1xf32>
    %28 = vector.broadcast %27 : vector<8x1xf32> to vector<8x8xf32>
    %29 = arith.mulf %24, %28 : vector<8x8xf32>
    %30 = arith.truncf %29 : vector<8x8xf32> to vector<8x8xbf16>
    %cst_13 = arith.constant dense<0.000000e+00> : vector<8x16xf32>
    %31 = tpu.matmul %30, %10, %cst_13 {dimension_numbers = #tpu.dot_dimension_numbers<[1], [0], [0], [1], [0, 0, 1, 1], [], []>} : vector<8x8xbf16>, vector<8x16xbf16>, vector<8x16xf32> -> vector<8x16xf32>
    %cst_14 = arith.constant 0.000000e+00 : f32
    %32 = vector.broadcast %cst_14 : f32 to vector<8x16xf32>
    %33 = arith.cmpf ogt, %31, %32 : vector<8x16xf32>
    %cst_15 = arith.constant 0.000000e+00 : f32
    %34 = vector.broadcast %cst_15 : f32 to vector<8x16xf32>
    %35 = arith.minimumf %31, %34 : vector<8x16xf32>
    %36 = math.exp %35 : vector<8x16xf32>
    %cst_16 = arith.constant 1.000000e+00 : f32
    %37 = vector.broadcast %cst_16 : f32 to vector<8x16xf32>
    %38 = arith.subf %36, %37 : vector<8x16xf32>
    %39 = arith.select %33, %31, %38 : vector<8x16xi1>, vector<8x16xf32>
    %c0_17 = arith.constant 0 : index
    %c0_18 = arith.constant 0 : index
    %c0_19 = arith.constant 0 : index
    %40 = vector.load %arg5[%c0_17, %c0_18, %c0_19] : memref<1x8x16xf32, #tpu.memory_space<vmem>>, vector<1x8x16xf32>
    %41 = vector.shape_cast %40 : vector<1x8x16xf32> to vector<8x16xf32>
    %42 = vector.shape_cast %39 : vector<8x16xf32> to vector<1x8x16xf32>
    tpu.vector_store %arg5[%c0_17, %c0_18, %c0_19], %42 {strides = array<i32>} : memref<1x8x16xf32, #tpu.memory_space<vmem>>, vector<1x8x16xf32>,
    return
  }
  func.func @transform_0(%arg0: i32) -> (i32, i32, i32) {
    %c0_i32 = arith.constant 0 : i32
    %c0_i32_0 = arith.constant 0 : i32
    %c0_i32_1 = arith.constant 0 : i32
    return %arg0, %c0_i32, %c0_i32_0 : i32, i32, i32
  }
  func.func @transform_1(%arg0: i32) -> (i32, i32) {
    %c0_i32 = arith.constant 0 : i32
    %c0_i32_0 = arith.constant 0 : i32
    %c0_i32_1 = arith.constant 0 : i32
    return %c0_i32, %c0_i32_0 : i32, i32
  }
  func.func @transform_2(%arg0: i32) -> (i32, i32) {
    %c0_i32 = arith.constant 0 : i32
    %c0_i32_0 = arith.constant 0 : i32
    %c0_i32_1 = arith.constant 0 : i32
    return %c0_i32, %c0_i32_0 : i32, i32
  }
  func.func @transform_3(%arg0: i32) -> (i32, i32) {
    %c0_i32 = arith.constant 0 : i32
    %c0_i32_0 = arith.constant 0 : i32
    %c0_i32_1 = arith.constant 0 : i32
    return %c0_i32, %c0_i32_0 : i32, i32
  }
  func.func @transform_4(%arg0: i32) -> (i32, i32, i32) {
    %c0_i32 = arith.constant 0 : i32
    %c0_i32_0 = arith.constant 0 : i32
    %c0_i32_1 = arith.constant 0 : i32
    return %arg0, %c0_i32, %c0_i32_0 : i32, i32, i32
  }
}

module attributes {stable_mosaic.version = 11 : i64} {
  func.func @gat_layer_kernel(%arg0: i32, %arg1: memref<1x8x16xbf16, #tpu.memory_space<vmem>>, %arg2: memref<8x8xf32, #tpu.memory_space<vmem>>, %arg3: memref<16x64xbf16, #tpu.memory_space<vmem>>, %arg4: memref<64x8xf32, #tpu.memory_space<vmem>>, %arg5: memref<1x8x64xf32, #tpu.memory_space<vmem>>) attributes {dimension_semantics = [#tpu.dimension_semantics<parallel>], iteration_bounds = array<i64: 4>, scalar_prefetch = 0 : i64, scratch_operands = 0 : i64, tpu.core_type = #tpu.core_type<tc>, window_params = [{transform_indices = @transform_0, window_bounds = array<i64: 1, 8, 16>}, {pipeline_mode = #tpu.pipeline_mode<synchronous>, transform_indices = @transform_1, window_bounds = array<i64: 8, 8>}, {pipeline_mode = #tpu.pipeline_mode<synchronous>, transform_indices = @transform_2, window_bounds = array<i64: 16, 64>}, {pipeline_mode = #tpu.pipeline_mode<synchronous>, transform_indices = @transform_3, window_bounds = array<i64: 64, 8>}, {transform_indices = @transform_4, window_bounds = array<i64: 1, 8, 64>}]} {
    %c0 = arith.constant 0 : index
    %c0_0 = arith.constant 0 : index
    %c0_1 = arith.constant 0 : index
    %0 = vector.load %arg1[%c0, %c0_0, %c0_1] : memref<1x8x16xbf16, #tpu.memory_space<vmem>>, vector<1x8x16xbf16>
    %1 = vector.shape_cast %0 : vector<1x8x16xbf16> to vector<8x16xbf16>
    %c0_2 = arith.constant 0 : index
    %c0_3 = arith.constant 0 : index
    %2 = vector.load %arg3[%c0_2, %c0_3] : memref<16x64xbf16, #tpu.memory_space<vmem>>, vector<16x64xbf16>
    %cst = arith.constant dense<0.000000e+00> : vector<8x64xf32>
    %3 = tpu.matmul %1, %2, %cst {dimension_numbers = #tpu.dot_dimension_numbers<[1], [0], [0], [1], [0, 0, 1, 1], [], []>} : vector<8x16xbf16>, vector<16x64xbf16>, vector<8x64xf32> -> vector<8x64xf32>
    %c0_4 = arith.constant 0 : index
    %c0_5 = arith.constant 0 : index
    %4 = vector.load %arg4[%c0_4, %c0_5] : memref<64x8xf32, #tpu.memory_space<vmem>>, vector<64x8xf32>
    %cst_6 = arith.constant dense<0.000000e+00> : vector<8x8xf32>
    %5 = tpu.matmul %3, %4, %cst_6 {dimension_numbers = #tpu.dot_dimension_numbers<[1], [0], [0], [1], [0, 0, 1, 1], [], []>} : vector<8x64xf32>, vector<64x8xf32>, vector<8x8xf32> -> vector<8x8xf32>
    %6 = vector.extract_strided_slice %5 {offsets = [0, 0], sizes = [8, 4], strides = [1, 1]} : vector<8x8xf32> to vector<8x4xf32>
    %7 = vector.extract_strided_slice %5 {offsets = [0, 4], sizes = [8, 4], strides = [1, 1]} : vector<8x8xf32> to vector<8x4xf32>
    %8 = tpu.transpose %7, [1, 0] : vector<8x4xf32> -> vector<4x8xf32>
    %c0_7 = arith.constant 0 : index
    %c0_8 = arith.constant 0 : index
    %9 = vector.load %arg2[%c0_7, %c0_8] : memref<8x8xf32, #tpu.memory_space<vmem>>, vector<8x8xf32>
    %10 = arith.truncf %3 : vector<8x64xf32> to vector<8x64xbf16>
    %11 = vector.extract_strided_slice %6 {offsets = [0, 0], sizes = [8, 1], strides = [1, 1]} : vector<8x4xf32> to vector<8x1xf32>
    %12 = vector.extract_strided_slice %8 {offsets = [0, 0], sizes = [1, 8], strides = [1, 1]} : vector<4x8xf32> to vector<1x8xf32>
    %13 = vector.broadcast %11 : vector<8x1xf32> to vector<8x8xf32>
    %14 = vector.broadcast %12 : vector<1x8xf32> to vector<8x8xf32>
    %15 = arith.addf %13, %14 : vector<8x8xf32>
    %cst_9 = arith.constant 0.000000e+00 : f32
    %16 = vector.broadcast %cst_9 : f32 to vector<8x8xf32>
    %17 = arith.cmpf ogt, %15, %16 : vector<8x8xf32>
    %cst_10 = arith.constant 1.000000e-01 : f32
    %18 = vector.broadcast %cst_10 : f32 to vector<8x8xf32>
    %19 = arith.mulf %18, %15 : vector<8x8xf32>
    %20 = arith.select %17, %15, %19 : vector<8x8xi1>, vector<8x8xf32>
    %21 = arith.addf %20, %9 : vector<8x8xf32>
    %cst_11 = arith.constant dense<0xFF800000> : vector<8xf32>
    %22 = vector.multi_reduction <maximumf>, %21, %cst_11 [1] : vector<8x8xf32> to vector<8xf32>
    %23 = vector.shape_cast %22 : vector<8xf32> to vector<8x1xf32>
    %24 = vector.broadcast %23 : vector<8x1xf32> to vector<8x8xf32>
    %25 = arith.subf %21, %24 : vector<8x8xf32>
    %26 = math.exp %25 : vector<8x8xf32>
    %cst_12 = arith.constant dense<0.000000e+00> : vector<8xf32>
    %27 = vector.multi_reduction <add>, %26, %cst_12 [1] : vector<8x8xf32> to vector<8xf32>
    %28 = vector.shape_cast %27 : vector<8xf32> to vector<8x1xf32>
    %29 = tpu.reciprocal %28 {approx = true} : vector<8x1xf32> -> vector<8x1xf32>
    %30 = vector.broadcast %29 : vector<8x1xf32> to vector<8x8xf32>
    %31 = arith.mulf %26, %30 : vector<8x8xf32>
    %32 = arith.truncf %31 : vector<8x8xf32> to vector<8x8xbf16>
    %33 = vector.extract_strided_slice %10 {offsets = [0, 0], sizes = [8, 16], strides = [1, 1]} : vector<8x64xbf16> to vector<8x16xbf16>
    %cst_13 = arith.constant dense<0.000000e+00> : vector<8x16xf32>
    %34 = tpu.matmul %32, %33, %cst_13 {dimension_numbers = #tpu.dot_dimension_numbers<[1], [0], [0], [1], [0, 0, 1, 1], [], []>} : vector<8x8xbf16>, vector<8x16xbf16>, vector<8x16xf32> -> vector<8x16xf32>
    %cst_14 = arith.constant 0.000000e+00 : f32
    %35 = vector.broadcast %cst_14 : f32 to vector<8x16xf32>
    %36 = arith.cmpf ogt, %34, %35 : vector<8x16xf32>
    %cst_15 = arith.constant 0.000000e+00 : f32
    %37 = vector.broadcast %cst_15 : f32 to vector<8x16xf32>
    %38 = arith.minimumf %34, %37 : vector<8x16xf32>
    %39 = math.exp %38 : vector<8x16xf32>
    %cst_16 = arith.constant 1.000000e+00 : f32
    %40 = vector.broadcast %cst_16 : f32 to vector<8x16xf32>
    %41 = arith.subf %39, %40 : vector<8x16xf32>
    %42 = arith.select %36, %34, %41 : vector<8x16xi1>, vector<8x16xf32>
    %43 = vector.extract_strided_slice %6 {offsets = [0, 1], sizes = [8, 1], strides = [1, 1]} : vector<8x4xf32> to vector<8x1xf32>
    %44 = vector.extract_strided_slice %8 {offsets = [1, 0], sizes = [1, 8], strides = [1, 1]} : vector<4x8xf32> to vector<1x8xf32>
    %45 = vector.broadcast %43 : vector<8x1xf32> to vector<8x8xf32>
    %46 = vector.broadcast %44 : vector<1x8xf32> to vector<8x8xf32>
    %47 = arith.addf %45, %46 : vector<8x8xf32>
    %cst_17 = arith.constant 0.000000e+00 : f32
    %48 = vector.broadcast %cst_17 : f32 to vector<8x8xf32>
    %49 = arith.cmpf ogt, %47, %48 : vector<8x8xf32>
    %cst_18 = arith.constant 1.000000e-01 : f32
    %50 = vector.broadcast %cst_18 : f32 to vector<8x8xf32>
    %51 = arith.mulf %50, %47 : vector<8x8xf32>
    %52 = arith.select %49, %47, %51 : vector<8x8xi1>, vector<8x8xf32>
    %53 = arith.addf %52, %9 : vector<8x8xf32>
    %cst_19 = arith.constant dense<0xFF800000> : vector<8xf32>
    %54 = vector.multi_reduction <maximumf>, %53, %cst_19 [1] : vector<8x8xf32> to vector<8xf32>
    %55 = vector.shape_cast %54 : vector<8xf32> to vector<8x1xf32>
    %56 = vector.broadcast %55 : vector<8x1xf32> to vector<8x8xf32>
    %57 = arith.subf %53, %56 : vector<8x8xf32>
    %58 = math.exp %57 : vector<8x8xf32>
    %cst_20 = arith.constant dense<0.000000e+00> : vector<8xf32>
    %59 = vector.multi_reduction <add>, %58, %cst_20 [1] : vector<8x8xf32> to vector<8xf32>
    %60 = vector.shape_cast %59 : vector<8xf32> to vector<8x1xf32>
    %61 = tpu.reciprocal %60 {approx = true} : vector<8x1xf32> -> vector<8x1xf32>
    %62 = vector.broadcast %61 : vector<8x1xf32> to vector<8x8xf32>
    %63 = arith.mulf %58, %62 : vector<8x8xf32>
    %64 = arith.truncf %63 : vector<8x8xf32> to vector<8x8xbf16>
    %65 = vector.extract_strided_slice %10 {offsets = [0, 16], sizes = [8, 16], strides = [1, 1]} : vector<8x64xbf16> to vector<8x16xbf16>
    %cst_21 = arith.constant dense<0.000000e+00> : vector<8x16xf32>
    %66 = tpu.matmul %64, %65, %cst_21 {dimension_numbers = #tpu.dot_dimension_numbers<[1], [0], [0], [1], [0, 0, 1, 1], [], []>} : vector<8x8xbf16>, vector<8x16xbf16>, vector<8x16xf32> -> vector<8x16xf32>
    %cst_22 = arith.constant 0.000000e+00 : f32
    %67 = vector.broadcast %cst_22 : f32 to vector<8x16xf32>
    %68 = arith.cmpf ogt, %66, %67 : vector<8x16xf32>
    %cst_23 = arith.constant 0.000000e+00 : f32
    %69 = vector.broadcast %cst_23 : f32 to vector<8x16xf32>
    %70 = arith.minimumf %66, %69 : vector<8x16xf32>
    %71 = math.exp %70 : vector<8x16xf32>
    %cst_24 = arith.constant 1.000000e+00 : f32
    %72 = vector.broadcast %cst_24 : f32 to vector<8x16xf32>
    %73 = arith.subf %71, %72 : vector<8x16xf32>
    %74 = arith.select %68, %66, %73 : vector<8x16xi1>, vector<8x16xf32>
    %75 = vector.extract_strided_slice %6 {offsets = [0, 2], sizes = [8, 1], strides = [1, 1]} : vector<8x4xf32> to vector<8x1xf32>
    %76 = vector.extract_strided_slice %8 {offsets = [2, 0], sizes = [1, 8], strides = [1, 1]} : vector<4x8xf32> to vector<1x8xf32>
    %77 = vector.broadcast %75 : vector<8x1xf32> to vector<8x8xf32>
    %78 = vector.broadcast %76 : vector<1x8xf32> to vector<8x8xf32>
    %79 = arith.addf %77, %78 : vector<8x8xf32>
    %cst_25 = arith.constant 0.000000e+00 : f32
    %80 = vector.broadcast %cst_25 : f32 to vector<8x8xf32>
    %81 = arith.cmpf ogt, %79, %80 : vector<8x8xf32>
    %cst_26 = arith.constant 1.000000e-01 : f32
    %82 = vector.broadcast %cst_26 : f32 to vector<8x8xf32>
    %83 = arith.mulf %82, %79 : vector<8x8xf32>
    %84 = arith.select %81, %79, %83 : vector<8x8xi1>, vector<8x8xf32>
    %85 = arith.addf %84, %9 : vector<8x8xf32>
    %cst_27 = arith.constant dense<0xFF800000> : vector<8xf32>
    %86 = vector.multi_reduction <maximumf>, %85, %cst_27 [1] : vector<8x8xf32> to vector<8xf32>
    %87 = vector.shape_cast %86 : vector<8xf32> to vector<8x1xf32>
    %88 = vector.broadcast %87 : vector<8x1xf32> to vector<8x8xf32>
    %89 = arith.subf %85, %88 : vector<8x8xf32>
    %90 = math.exp %89 : vector<8x8xf32>
    %cst_28 = arith.constant dense<0.000000e+00> : vector<8xf32>
    %91 = vector.multi_reduction <add>, %90, %cst_28 [1] : vector<8x8xf32> to vector<8xf32>
    %92 = vector.shape_cast %91 : vector<8xf32> to vector<8x1xf32>
    %93 = tpu.reciprocal %92 {approx = true} : vector<8x1xf32> -> vector<8x1xf32>
    %94 = vector.broadcast %93 : vector<8x1xf32> to vector<8x8xf32>
    %95 = arith.mulf %90, %94 : vector<8x8xf32>
    %96 = arith.truncf %95 : vector<8x8xf32> to vector<8x8xbf16>
    %97 = vector.extract_strided_slice %10 {offsets = [0, 32], sizes = [8, 16], strides = [1, 1]} : vector<8x64xbf16> to vector<8x16xbf16>
    %cst_29 = arith.constant dense<0.000000e+00> : vector<8x16xf32>
    %98 = tpu.matmul %96, %97, %cst_29 {dimension_numbers = #tpu.dot_dimension_numbers<[1], [0], [0], [1], [0, 0, 1, 1], [], []>} : vector<8x8xbf16>, vector<8x16xbf16>, vector<8x16xf32> -> vector<8x16xf32>
    %cst_30 = arith.constant 0.000000e+00 : f32
    %99 = vector.broadcast %cst_30 : f32 to vector<8x16xf32>
    %100 = arith.cmpf ogt, %98, %99 : vector<8x16xf32>
    %cst_31 = arith.constant 0.000000e+00 : f32
    %101 = vector.broadcast %cst_31 : f32 to vector<8x16xf32>
    %102 = arith.minimumf %98, %101 : vector<8x16xf32>
    %103 = math.exp %102 : vector<8x16xf32>
    %cst_32 = arith.constant 1.000000e+00 : f32
    %104 = vector.broadcast %cst_32 : f32 to vector<8x16xf32>
    %105 = arith.subf %103, %104 : vector<8x16xf32>
    %106 = arith.select %100, %98, %105 : vector<8x16xi1>, vector<8x16xf32>
    %107 = vector.extract_strided_slice %6 {offsets = [0, 3], sizes = [8, 1], strides = [1, 1]} : vector<8x4xf32> to vector<8x1xf32>
    %108 = vector.extract_strided_slice %8 {offsets = [3, 0], sizes = [1, 8], strides = [1, 1]} : vector<4x8xf32> to vector<1x8xf32>
    %109 = vector.broadcast %107 : vector<8x1xf32> to vector<8x8xf32>
    %110 = vector.broadcast %108 : vector<1x8xf32> to vector<8x8xf32>
    %111 = arith.addf %109, %110 : vector<8x8xf32>
    %cst_33 = arith.constant 0.000000e+00 : f32
    %112 = vector.broadcast %cst_33 : f32 to vector<8x8xf32>
    %113 = arith.cmpf ogt, %111, %112 : vector<8x8xf32>
    %cst_34 = arith.constant 1.000000e-01 : f32
    %114 = vector.broadcast %cst_34 : f32 to vector<8x8xf32>
    %115 = arith.mulf %114, %111 : vector<8x8xf32>
    %116 = arith.select %113, %111, %115 : vector<8x8xi1>, vector<8x8xf32>
    %117 = arith.addf %116, %9 : vector<8x8xf32>
    %cst_35 = arith.constant dense<0xFF800000> : vector<8xf32>
    %118 = vector.multi_reduction <maximumf>, %117, %cst_35 [1] : vector<8x8xf32> to vector<8xf32>
    %119 = vector.shape_cast %118 : vector<8xf32> to vector<8x1xf32>
    %120 = vector.broadcast %119 : vector<8x1xf32> to vector<8x8xf32>
    %121 = arith.subf %117, %120 : vector<8x8xf32>
    %122 = math.exp %121 : vector<8x8xf32>
    %cst_36 = arith.constant dense<0.000000e+00> : vector<8xf32>
    %123 = vector.multi_reduction <add>, %122, %cst_36 [1] : vector<8x8xf32> to vector<8xf32>
    %124 = vector.shape_cast %123 : vector<8xf32> to vector<8x1xf32>
    %125 = tpu.reciprocal %124 {approx = true} : vector<8x1xf32> -> vector<8x1xf32>
    %126 = vector.broadcast %125 : vector<8x1xf32> to vector<8x8xf32>
    %127 = arith.mulf %122, %126 : vector<8x8xf32>
    %128 = arith.truncf %127 : vector<8x8xf32> to vector<8x8xbf16>
    %129 = vector.extract_strided_slice %10 {offsets = [0, 48], sizes = [8, 16], strides = [1, 1]} : vector<8x64xbf16> to vector<8x16xbf16>
    %cst_37 = arith.constant dense<0.000000e+00> : vector<8x16xf32>
    %130 = tpu.matmul %128, %129, %cst_37 {dimension_numbers = #tpu.dot_dimension_numbers<[1], [0], [0], [1], [0, 0, 1, 1], [], []>} : vector<8x8xbf16>, vector<8x16xbf16>, vector<8x16xf32> -> vector<8x16xf32>
    %cst_38 = arith.constant 0.000000e+00 : f32
    %131 = vector.broadcast %cst_38 : f32 to vector<8x16xf32>
    %132 = arith.cmpf ogt, %130, %131 : vector<8x16xf32>
    %cst_39 = arith.constant 0.000000e+00 : f32
    %133 = vector.broadcast %cst_39 : f32 to vector<8x16xf32>
    %134 = arith.minimumf %130, %133 : vector<8x16xf32>
    %135 = math.exp %134 : vector<8x16xf32>
    %cst_40 = arith.constant 1.000000e+00 : f32
    %136 = vector.broadcast %cst_40 : f32 to vector<8x16xf32>
    %137 = arith.subf %135, %136 : vector<8x16xf32>
    %138 = arith.select %132, %130, %137 : vector<8x16xi1>, vector<8x16xf32>
    %139 = tpu.concatenate %42, %74, %106, %138 in 1 : vector<8x16xf32>, vector<8x16xf32>, vector<8x16xf32>, vector<8x16xf32> -> vector<8x64xf32>
    %c0_41 = arith.constant 0 : index
    %c0_42 = arith.constant 0 : index
    %c0_43 = arith.constant 0 : index
    %140 = vector.load %arg5[%c0_41, %c0_42, %c0_43] : memref<1x8x64xf32, #tpu.memory_space<vmem>>, vector<1x8x64xf32>
    %141 = vector.shape_cast %140 : vector<1x8x64xf32> to vector<8x64xf32>
    %142 = vector.shape_cast %139 : vector<8x64xf32> to vector<1x8x64xf32>
    tpu.vector_store %arg5[%c0_41, %c0_42, %c0_43], %142 {strides = array<i32>} : memref<1x8x64xf32, #tpu.memory_space<vmem>>, vector<1x8x64xf32>,
    return
  }
  func.func @transform_0(%arg0: i32) -> (i32, i32, i32) {
    %c0_i32 = arith.constant 0 : i32
    %c0_i32_0 = arith.constant 0 : i32
    %c0_i32_1 = arith.constant 0 : i32
    return %arg0, %c0_i32, %c0_i32_0 : i32, i32, i32
  }
  func.func @transform_1(%arg0: i32) -> (i32, i32) {
    %c0_i32 = arith.constant 0 : i32
    %c0_i32_0 = arith.constant 0 : i32
    %c0_i32_1 = arith.constant 0 : i32
    return %c0_i32, %c0_i32_0 : i32, i32
  }
  func.func @transform_2(%arg0: i32) -> (i32, i32) {
    %c0_i32 = arith.constant 0 : i32
    %c0_i32_0 = arith.constant 0 : i32
    %c0_i32_1 = arith.constant 0 : i32
    return %c0_i32, %c0_i32_0 : i32, i32
  }
  func.func @transform_3(%arg0: i32) -> (i32, i32) {
    %c0_i32 = arith.constant 0 : i32
    %c0_i32_0 = arith.constant 0 : i32
    %c0_i32_1 = arith.constant 0 : i32
    return %c0_i32, %c0_i32_0 : i32, i32
  }
  func.func @transform_4(%arg0: i32) -> (i32, i32, i32) {
    %c0_i32 = arith.constant 0 : i32
    %c0_i32_0 = arith.constant 0 : i32
    %c0_i32_1 = arith.constant 0 : i32
    return %arg0, %c0_i32, %c0_i32_0 : i32, i32, i32
  }
}

</mosaic_0001>

<llo_original>
// kernel: gat_forward.3
$region0: #{gat_forward.3}
  #allocation0 [shape = 'u32[]', space=smem, size = 0x4, offset = 0x4, fixed_abs, tag = 'smem constant byte address 0x4 - core index']
  #allocation1 [shape = 'u32[144,128]{1,0:T(1,128)}', space=vmem, size = 0x12000, scoped, tag = 'internal scratch']
  %s0 = inlined_call_operand.vmem [shape: bf16[4,8,64], index: 0, kind: input, shape index: {}]
  %s1 = inlined_call_operand.vmem [shape: f32[8,8], index: 1, kind: input, shape index: {}]
  %s2 = inlined_call_operand.vmem [shape: bf16[64,16], index: 2, kind: input, shape index: {}]
  %s3 = inlined_call_operand.vmem [shape: f32[16,2], index: 3, kind: input, shape index: {}]
  %s4 = inlined_call_operand.hbm [shape: f32[4,8,16], index: 4, kind: output, shape index: {}]
  %s5 = sld [smem:[#allocation0]]
  $region49: #{gat_forward.3} parent=0
    _
  %s7 = ssub.s32 1, %s5
  %s8 = scalar_select 0, %s7, %s5
  $region1: #{gat_forward.3} parent=0
    #allocation2 [shape = 'u8[8192]{0}', space=vmem, size = 0x2000, scoped, tag = 'output window, operand 0']
    #allocation3 [shape = 's32[2]{0}', space=sflag, size = 0x8, scoped, tag = 'scoped memory for gat_forward.3']
    %9 = vsyncpa [#allocation3], 0
    %s10 = scalar_lea.sflag [#allocation3], 1
    %11 = vsyncpa %s10, 0
    loop: start=0, step=1, limit=6
    $region2: #{gat_forward.3} parent=1 // loop_pre_header
      _
    $region3: #{gat_forward.3} parent=1 // loop_header
      %s13 = sphi 0, %s17
      %p14 = scmp.ge.s32.totalorder %s13, 6
      %s23 = sphi 0, %s25
      %s26 = sphi 0, %s23
      %s27 = sphi 0, %s26
      %s43 = sphi 0, %s27
      %s47 = sphi 0, %s47
      %s49 = sphi 0, %s47
      %s50 = sphi 0, %s49
      %s64 = sphi 0, %s50
      %s68 = sphi 0, %s68
      %s70 = sphi 0, %s68
      %s71 = sphi 0, %s70
      %s85 = sphi 0, %s71
      %s89 = sphi 0, %s89
      %s91 = sphi 0, %s89
      %s92 = sphi 0, %s91
      %s106 = sphi 0, %s92
      %s112 = sphi 0, %s114
      %s115 = sphi 0, %s112
      %s116 = sphi 0, %s115
      %s132 = sphi 0, %s116
    $region4: #{gat_forward.3} parent=1 // loop_header_branch
      %16 = sbr.rel (%p14) target = $region8
    $region5: #{gat_forward.3} parent=1 // loop_body
      %s18 = ssub.s32 %s13, 1
      %s19 = ssub.s32 %s13, 2
      %s20 = sadd.s32 %s13, 1
      %s21 = ssub.s32 %s13, %s20
      %p22 = scmp.eq.s32.totalorder %s21, 0
      %s24 = sadd.s32 %s23, 1
      %s25 = scalar_select %p22, %s23, %s24
      %p28 = pneg %p22
      %p29 = scmp.eq.s32.totalorder %s13, 3
      %p30 = por %p28, %p29
      %p31 = scmp.ne.s32.totalorder %s23, %s26
      %p32 = scmp.eq.s32.totalorder %s13, 0
      %p33 = por %p31, %p32
      %p34 = scmp.ne.s32.totalorder %s23, %s26
      %p35 = scmp.eq.s32.totalorder %s18, 3
      %p36 = por %p34, %p35
      %p37 = scmp.ne.s32.totalorder %s26, %s27
      %p38 = scmp.eq.s32.totalorder %s18, 0
      %p39 = por %p37, %p38
      %p40 = scmp.ne.s32.totalorder %s26, %s27
      %p41 = scmp.eq.s32.totalorder %s19, 3
      %p42 = por %p40, %p41
      %p44 = scmp.ne.s32.totalorder %s27, %s43
      %p45 = scmp.eq.s32.totalorder %s19, 0
      %p46 = por %p44, %p45
      %s48 = sadd.s32 %s47, 1
      %p51 = scmp.eq.s32.totalorder %s13, 3
      %p52 = scmp.ne.s32.totalorder %s47, %s49
      %p53 = scmp.eq.s32.totalorder %s13, 0
      %p54 = por %p52, %p53
      %p55 = scmp.ne.s32.totalorder %s47, %s49
      %p56 = scmp.eq.s32.totalorder %s18, 3
      %p57 = por %p55, %p56
      %p58 = scmp.ne.s32.totalorder %s49, %s50
      %p59 = scmp.eq.s32.totalorder %s18, 0
      %p60 = por %p58, %p59
      %p61 = scmp.ne.s32.totalorder %s49, %s50
      %p62 = scmp.eq.s32.totalorder %s19, 3
      %p63 = por %p61, %p62
      %p65 = scmp.ne.s32.totalorder %s50, %s64
      %p66 = scmp.eq.s32.totalorder %s19, 0
      %p67 = por %p65, %p66
      %s69 = sadd.s32 %s68, 1
      %p72 = scmp.eq.s32.totalorder %s13, 3
      %p73 = scmp.ne.s32.totalorder %s68, %s70
      %p74 = scmp.eq.s32.totalorder %s13, 0
      %p75 = por %p73, %p74
      %p76 = scmp.ne.s32.totalorder %s68, %s70
      %p77 = scmp.eq.s32.totalorder %s18, 3
      %p78 = por %p76, %p77
      %p79 = scmp.ne.s32.totalorder %s70, %s71
      %p80 = scmp.eq.s32.totalorder %s18, 0
      %p81 = por %p79, %p80
      %p82 = scmp.ne.s32.totalorder %s70, %s71
      %p83 = scmp.eq.s32.totalorder %s19, 3
      %p84 = por %p82, %p83
      %p86 = scmp.ne.s32.totalorder %s71, %s85
      %p87 = scmp.eq.s32.totalorder %s19, 0
      %p88 = por %p86, %p87
      %s90 = sadd.s32 %s89, 1
      %p93 = scmp.eq.s32.totalorder %s13, 3
      %p94 = scmp.ne.s32.totalorder %s89, %s91
      %p95 = scmp.eq.s32.totalorder %s13, 0
      %p96 = por %p94, %p95
      %p97 = scmp.ne.s32.totalorder %s89, %s91
      %p98 = scmp.eq.s32.totalorder %s18, 3
      %p99 = por %p97, %p98
      %p100 = scmp.ne.s32.totalorder %s91, %s92
      %p101 = scmp.eq.s32.totalorder %s18, 0
      %p102 = por %p100, %p101
      %p103 = scmp.ne.s32.totalorder %s91, %s92
      %p104 = scmp.eq.s32.totalorder %s19, 3
      %p105 = por %p103, %p104
      %p107 = scmp.ne.s32.totalorder %s92, %s106
      %p108 = scmp.eq.s32.totalorder %s19, 0
      %p109 = por %p107, %p108
      %s110 = ssub.s32 %s13, %s20
      %p111 = scmp.eq.s32.totalorder %s110, 0
      %s113 = sadd.s32 %s112, 1
      %s114 = scalar_select %p111, %s112, %s113
      %p117 = pneg %p111
      %p118 = scmp.eq.s32.totalorder %s13, 3
      %p119 = por %p117, %p118
      %p120 = scmp.ne.s32.totalorder %s112, %s115
      %p121 = scmp.eq.s32.totalorder %s13, 0
      %p122 = por %p120, %p121
      %p123 = scmp.ne.s32.totalorder %s112, %s115
      %p124 = scmp.eq.s32.totalorder %s18, 3
      %p125 = por %p123, %p124
      %p126 = scmp.ne.s32.totalorder %s115, %s116
      %p127 = scmp.eq.s32.totalorder %s18, 0
      %p128 = por %p126, %p127
      %p129 = scmp.ne.s32.totalorder %s115, %s116
      %p130 = scmp.eq.s32.totalorder %s19, 3
      %p131 = por %p129, %p130
      %p133 = scmp.ne.s32.totalorder %s116, %s132
      %p134 = scmp.eq.s32.totalorder %s19, 0
      %p135 = por %p133, %p134
      %p136 = scmp.le.s32.totalorder 1, %s13
      %p137 = scmp.lt.s32.totalorder %s13, 5
      %p138 = pnand %p136, %p137
      %p139 = pneg %p138
      // Predicated region
      $region9: #{gat_forward.3} parent=5 // pred_check
        _
      $region10: #{gat_forward.3} parent=5 // pred_check_branch
        %141 = sbr.rel (%p138) target = $region12
      $region11: #{gat_forward.3} parent=5 // pred_region
        %s142 = ssub.s32 %s13, 1
        // Predicated region
        $region13: #{gat_forward.3} parent=11 // pred_check
          %p143 = pneg %p60
        $region14: #{gat_forward.3} parent=11 // pred_check_branch
          %145 = sbr.rel (%p143) target = $region16
        $region15: #{gat_forward.3} parent=11 // pred_region
          _
        $region16: #{gat_forward.3} parent=11 // pred_fallthru
          _
        // Predicated region
        $region17: #{gat_forward.3} parent=11 // pred_check
          %p146 = pneg %p81
        $region18: #{gat_forward.3} parent=11 // pred_check_branch
          %148 = sbr.rel (%p146) target = $region20
        $region19: #{gat_forward.3} parent=11 // pred_region
          _
        $region20: #{gat_forward.3} parent=11 // pred_fallthru
          _
        // Predicated region
        $region21: #{gat_forward.3} parent=11 // pred_check
          %p149 = pneg %p102
        $region22: #{gat_forward.3} parent=11 // pred_check_branch
          %151 = sbr.rel (%p149) target = $region24
        $region23: #{gat_forward.3} parent=11 // pred_region
          _
        $region24: #{gat_forward.3} parent=11 // pred_fallthru
          _
      $region12: #{gat_forward.3} parent=5 // pred_fallthru
        _
      %p152 = scmp.lt.s32.totalorder %s13, 4
      // Predicated region
      $region25: #{gat_forward.3} parent=5 // pred_check
        %p153 = pneg %p152
      $region26: #{gat_forward.3} parent=5 // pred_check_branch
        %155 = sbr.rel (%p153) target = $region28
      $region27: #{gat_forward.3} parent=5 // pred_region
        // Predicated region
        $region29: #{gat_forward.3} parent=27 // pred_check
          %p156 = pneg %p33
        $region30: #{gat_forward.3} parent=27 // pred_check_branch
          %158 = sbr.rel (%p156) target = $region32
        $region31: #{gat_forward.3} parent=27 // pred_region
          %p159 = scmp.lt.s32.totalorder %s13, 3
          %s160 = scalar_select %p159, %s13, 3
          %s161 = smul.addr %s160, 4
          %s162 = scalar_lea.vmem %s0, %s161
        $region32: #{gat_forward.3} parent=27 // pred_fallthru
          _
      $region28: #{gat_forward.3} parent=5 // pred_fallthru
        _
      %p163 = scmp.le.s32.totalorder 1, %s13
      %p164 = scmp.lt.s32.totalorder %s13, 5
      %p165 = pnand %p163, %p164
      %p166 = pneg %p165
      // Predicated region
      $region33: #{gat_forward.3} parent=5 // pred_check
        _
      $region34: #{gat_forward.3} parent=5 // pred_check_branch
        %168 = sbr.rel (%p165) target = $region36
      $region35: #{gat_forward.3} parent=5 // pred_region
        %s169 = ssub.s32 %s13, 1
        %p170 = scmp.lt.s32.totalorder %s18, 3
        %s171 = scalar_select %p170, %s18, 3
        %s172 = smul.addr %s171, 4
        %s173 = scalar_lea.vmem %s0, %s172
        %p174 = pneg %p39
        %p175 = pneg %p36
        %p176 = pneg %p60
        %p177 = pneg %p57
        %p178 = pneg %p81
        %p179 = pneg %p78
        %p180 = pneg %p102
        %p181 = pneg %p99
        %p182 = pneg %p128
        %p183 = pneg %p125
        %s184 = sand.u32 %s115, 1
        %s185 = scalar_lea.sflag [#allocation3], %s184
        %s186 = sand.u32 %s115, 1
        %s187 = smul.addr %s186, 8
        %s188 = scalar_lea.vmem [#allocation2], %s187
        %p189 = scmp.lt.s32.totalorder %s18, 3
        %s190 = scalar_select %p189, %s18, 3
        %s191 = smul.addr %s190, 4
        %s192 = scalar_lea.vmem %s0, %s191
        %v194 = vld [vmem:[%s192] sm:$0xf]
        %v195 = vld [vmem:[%s2] sm:$0xf]
        %v196 = vld [vmem:[%s2 + $0x4] sm:$0xf]
        %v197 = vld [vmem:[%s2 + $0x8] sm:$0xf]
        %v198 = vld [vmem:[%s2 + $0xc] sm:$0xf]
        %v199 = vld [vmem:[%s2 + $0x10] sm:$0xf]
        %v200 = vld [vmem:[%s2 + $0x14] sm:$0xf]
        %v201 = vld [vmem:[%s2 + $0x18] sm:$0xf]
        %v202 = vld [vmem:[%s2 + $0x1c] sm:$0xf]
        %v211 = vunpack.c.l.b16 %v195
        %v212 = vunpack.c.l.b16 %v196
        %v213 = vunpack.c.l.b16 %v197
        %v214 = vunpack.c.l.b16 %v198
        %v215 = vunpack.c.l.b16 %v199
        %v216 = vunpack.c.l.b16 %v200
        %v217 = vunpack.c.l.b16 %v201
        %v218 = vunpack.c.l.b16 %v202
        %v219 = vpack.c.b16 %v212, %v211
        %v220 = vpack.c.b16 %v214, %v213
        %v221 = vpack.c.b16 %v216, %v215
        %v222 = vpack.c.b16 %v218, %v217
        %vm227 = vcmask 523264
        %v229 = vsel %vm227, %v194, 0
        %231 = vmatprep.subr.bf16.mxu0 0
        %232 = vmatpush1.bf16.msra.mxu0 %v219
        %233 = vmatprep.subr.bf16.mxu0 0
        %234 = vmatpush1.bf16.msra.mxu0 %v220
        %235 = vmatprep.subr.bf16.mxu0 0
        %236 = vmatpush1.bf16.msra.mxu0 %v221
        %237 = vmatprep.subr.bf16.mxu0 0
        %238 = vmatpush1.bf16.msra.mxu0 %v222
        %239 = vmatprep.subr.bf16.mxu0 0
        %240 = vmatpush1.bf16.msra.mxu0 0
        %241 = vmatprep.subr.bf16.mxu0 0
        %242 = vmatpush1.bf16.msra.mxu0 0
        %243 = vmatprep.subr.bf16.mxu0 0
        %244 = vmatpush1.bf16.msra.mxu0 0
        %245 = vmatprep.subr.bf16.mxu0 0
        %246 = vmatpush1.bf16.msra.mxu0 0
        %247 = vmatprep.subr.bf16.mxu0 0
        %248 = vmatpush1.bf16.msra.mxu0 0
        %249 = vmatprep.subr.bf16.mxu0 0
        %250 = vmatpush1.bf16.msra.mxu0 0
        %251 = vmatprep.subr.bf16.mxu0 0
        %252 = vmatpush1.bf16.msra.mxu0 0
        %253 = vmatprep.subr.bf16.mxu0 0
        %254 = vmatpush1.bf16.msra.mxu0 0
        %255 = vmatprep.subr.bf16.mxu0 0
        %256 = vmatpush1.bf16.msra.mxu0 0
        %257 = vmatprep.subr.bf16.mxu0 0
        %258 = vmatpush1.bf16.msra.mxu0 0
        %259 = vmatprep.subr.bf16.mxu0 0
        %260 = vmatpush1.bf16.msra.mxu0 0
        %261 = vmatprep.subr.bf16.mxu0 0
        %262 = vmatpush1.bf16.msra.mxu0 0
        %263 = vmatprep.mubr.bf16.mxu0 0
        %264 = vmatmul.mubr.bf16.gmra.mrb[0].mxu0 %v229
        %v265 = vpop.f32.mrb[0].mxu0
        %v266 = vadd.f32 0.0, %v265
        %v267 = vpop.f32.mrb[0].mxu0
        %v268 = vpop.f32.mrb[0].mxu0
        %v269 = vpop.f32.mrb[0].mxu0
        %270 = vdwg.mxu0
        %v271 = vld [vmem:[%s3] sm:$0xff]
        %v272 = vld [vmem:[%s3 + $0x8] sm:$0xff]
        %vm273 = vcmask 130048
        %v275 = vsel %vm273, %v266, 0
        %277 = vmatprep.subr.mxu0 0.0
        %278 = vmatpush1.msra.mxu0 %v271
        %279 = vmatprep.subr.mxu0 0.0
        %280 = vmatpush1.msra.mxu0 %v272
        %281 = vmatprep.subr.mxu0 0.0
        %282 = vmatpush1.msra.mxu0 0.0
        %283 = vmatprep.subr.mxu0 0.0
        %284 = vmatpush1.msra.mxu0 0.0
        %285 = vmatprep.subr.mxu0 0.0
        %286 = vmatpush1.msra.mxu0 0.0
        %287 = vmatprep.subr.mxu0 0.0
        %288 = vmatpush1.msra.mxu0 0.0
        %289 = vmatprep.subr.mxu0 0.0
        %290 = vmatpush1.msra.mxu0 0.0
        %291 = vmatprep.subr.mxu0 0.0
        %292 = vmatpush1.msra.mxu0 0.0
        %293 = vmatprep.subr.mxu0 0.0
        %294 = vmatpush1.msra.mxu0 0.0
        %295 = vmatprep.subr.mxu0 0.0
        %296 = vmatpush1.msra.mxu0 0.0
        %297 = vmatprep.subr.mxu0 0.0
        %298 = vmatpush1.msra.mxu0 0.0
        %299 = vmatprep.subr.mxu0 0.0
        %300 = vmatpush1.msra.mxu0 0.0
        %301 = vmatprep.subr.mxu0 0.0
        %302 = vmatpush1.msra.mxu0 0.0
        %303 = vmatprep.subr.mxu0 0.0
        %304 = vmatpush1.msra.mxu0 0.0
        %305 = vmatprep.subr.mxu0 0.0
        %306 = vmatpush1.msra.mxu0 0.0
        %307 = vmatprep.subr.mxu0 0.0
        %308 = vmatpush1.msra.mxu0 0.0
        %309 = vmatprep.subr.mxu0 0.0
        %310 = vmatpush1.msra.mxu0 0.0
        %311 = vmatprep.subr.mxu0 0.0
        %312 = vmatpush1.msra.mxu0 0.0
        %313 = vmatprep.subr.mxu0 0.0
        %314 = vmatpush1.msra.mxu0 0.0
        %315 = vmatprep.subr.mxu0 0.0
        %316 = vmatpush1.msra.mxu0 0.0
        %317 = vmatprep.subr.mxu0 0.0
        %318 = vmatpush1.msra.mxu0 0.0
        %319 = vmatprep.subr.mxu0 0.0
        %320 = vmatpush1.msra.mxu0 0.0
        %321 = vmatprep.subr.mxu0 0.0
        %322 = vmatpush1.msra.mxu0 0.0
        %323 = vmatprep.subr.mxu0 0.0
        %324 = vmatpush1.msra.mxu0 0.0
        %325 = vmatprep.subr.mxu0 0.0
        %326 = vmatpush1.msra.mxu0 0.0
        %327 = vmatprep.subr.mxu0 0.0
        %328 = vmatpush1.msra.mxu0 0.0
        %329 = vmatprep.subr.mxu0 0.0
        %330 = vmatpush1.msra.mxu0 0.0
        %331 = vmatprep.subr.mxu0 0.0
        %332 = vmatpush1.msra.mxu0 0.0
        %333 = vmatprep.subr.mxu0 0.0
        %334 = vmatpush1.msra.mxu0 0.0
        %335 = vmatprep.subr.mxu0 0.0
        %336 = vmatpush1.msra.mxu0 0.0
        %337 = vmatprep.subr.mxu0 0.0
        %338 = vmatpush1.msra.mxu0 0.0
        %339 = vmatprep.subr.mxu0 0.0
        %340 = vmatpush1.msra.mxu0 0.0
        %341 = vmatprep.mubr.f32.mxu0 0.0
        %342 = vmatmul.mubr.f32.gmra.mrb[0].mxu0 %v275
        %v343 = vpop.f32.mrb[0].mxu0
        %v344 = vadd.f32 0.0, %v343
        %v345 = vpop.f32.mrb[0].mxu0
        %346 = vdwg.mxu0
        %348 = vrot.lane.b32.xlu0 %v344, 127
        %v349 = vpop.permute.xlu0 %348
        %351 = vxpose.xlu0.b32.start [1/16] %v349, 128
        %352 = vxpose.xlu0.b32.cont [2/16] 0.0, 128
        %353 = vxpose.xlu0.b32.cont [3/16] 0.0, 128
        %354 = vxpose.xlu0.b32.cont [4/16] 0.0, 128
        %355 = vxpose.xlu0.b32.cont [5/16] 0.0, 128
        %356 = vxpose.xlu0.b32.cont [6/16] 0.0, 128
        %357 = vxpose.xlu0.b32.cont [7/16] 0.0, 128
        %358 = vxpose.xlu0.b32.cont [8/16] 0.0, 128
        %359 = vxpose.xlu0.b32.cont [9/16] 0.0, 128
        %360 = vxpose.xlu0.b32.cont [10/16] 0.0, 128
        %361 = vxpose.xlu0.b32.cont [11/16] 0.0, 128
        %362 = vxpose.xlu0.b32.cont [12/16] 0.0, 128
        %363 = vxpose.xlu0.b32.cont [13/16] 0.0, 128
        %364 = vxpose.xlu0.b32.cont [14/16] 0.0, 128
        %365 = vxpose.xlu0.b32.cont [15/16] 0.0, 128
        %366 = vxpose.xlu0.b32.end [16/16] 0.0, 128
        %v367 = vpop.trf.xlu0
        %v368 = vpop.trf.xlu0
        %v369 = vpop.trf.xlu0
        %v370 = vpop.trf.xlu0
        %v371 = vpop.trf.xlu0
        %v372 = vpop.trf.xlu0
        %v373 = vpop.trf.xlu0
        %v374 = vpop.trf.xlu0
        %v375 = vpop.trf.xlu0
        %v376 = vpop.trf.xlu0
        %v377 = vpop.trf.xlu0
        %v378 = vpop.trf.xlu0
        %v379 = vpop.trf.xlu0
        %v380 = vpop.trf.xlu0
        %v381 = vpop.trf.xlu0
        %v382 = vpop.trf.xlu0
        %v383 = vld [vmem:[%s1] sm:$0xff]
        %v384 = vpack.c.bf16 %v266, %v266
        %385 = vset.pattern.permute.xlu0 0
        %386 = vperm.xlu0 %385, %v344
        %v387 = vpop.permute.xlu0 %386
        %v389 = vlaneseq
        %v390 = vshrl.u32 %v389, 7
        %v391 = vsub.s32 0, %v390
        %v392 = vrot.slane %v367, %v391
        %v393 = vadd.f32 %v387, %v392
        %vm394 = vcmp.gt.f32.partialorder %v393, 0.0
        %v395 = vmul.f32 %v393, 0.1
        %v396 = vsel %vm394, %v393, %v395
        %v397 = vadd.f32 %v396, %v383
        %vm398 = vcmask 64512
        %v399 = vsel %vm398, %v397, -inf
        %400 = vmax.xlane.f32.xlu0 %v399
        %v401 = vpop.xlane.xlu0 %400
        %v402 = vsub.f32 %v397, %v401
        %v403 = vmul.f32 %v402, 1.442695
        %v404 = vpow.pop %v403
        %v405 = vsel %vm398, %v404, 0.0
        %406 = vadd.xlane.f32.xlu0 %v405
        %v407 = vpop.xlane.xlu0 %406
        %v408 = vrcp.pop %v407
        %v409 = vmul.f32 %v404, %v408
        %v410 = vpack.c.bf16 %v409, %v409
        %v412 = vsel %vm398, %v410, 0
        %vm414 = vcmask 1043456
        %v416 = vsel %vm414, %v384, 0
        %418 = vmatprep.subr.bf16.mxu0 0
        %419 = vmatpush1.bf16.msra.mxu0 %v416
        %420 = vmatprep.subr.bf16.mxu0 0
        %421 = vmatpush1.bf16.msra.mxu0 0
        %422 = vmatprep.subr.bf16.mxu0 0
        %423 = vmatpush1.bf16.msra.mxu0 0
        %424 = vmatprep.subr.bf16.mxu0 0
        %425 = vmatpush1.bf16.msra.mxu0 0
        %426 = vmatprep.subr.bf16.mxu0 0
        %427 = vmatpush1.bf16.msra.mxu0 0
        %428 = vmatprep.subr.bf16.mxu0 0
        %429 = vmatpush1.bf16.msra.mxu0 0
        %430 = vmatprep.subr.bf16.mxu0 0
        %431 = vmatpush1.bf16.msra.mxu0 0
        %432 = vmatprep.subr.bf16.mxu0 0
        %433 = vmatpush1.bf16.msra.mxu0 0
        %434 = vmatprep.subr.bf16.mxu0 0
        %435 = vmatpush1.bf16.msra.mxu0 0
        %436 = vmatprep.subr.bf16.mxu0 0
        %437 = vmatpush1.bf16.msra.mxu0 0
        %438 = vmatprep.subr.bf16.mxu0 0
        %439 = vmatpush1.bf16.msra.mxu0 0
        %440 = vmatprep.subr.bf16.mxu0 0
        %441 = vmatpush1.bf16.msra.mxu0 0
        %442 = vmatprep.subr.bf16.mxu0 0
        %443 = vmatpush1.bf16.msra.mxu0 0
        %444 = vmatprep.subr.bf16.mxu0 0
        %445 = vmatpush1.bf16.msra.mxu0 0
        %446 = vmatprep.subr.bf16.mxu0 0
        %447 = vmatpush1.bf16.msra.mxu0 0
        %448 = vmatprep.subr.bf16.mxu0 0
        %449 = vmatpush1.bf16.msra.mxu0 0
        %450 = vmatprep.mubr.bf16.mxu0 0
        %451 = vmatmul.mubr.bf16.gmra.mrb[0].mxu0 %v412
        %v452 = vpop.f32.mrb[0].mxu0
        %v453 = vadd.f32 0.0, %v452
        %v454 = vpop.f32.mrb[0].mxu0
        %v455 = vpop.f32.mrb[0].mxu0
        %v456 = vpop.f32.mrb[0].mxu0
        %457 = vdwg.mxu0
        %vm458 = vcmp.gt.f32.partialorder %v453, 0.0
        %v459 = vmin.f32 %v453, 0.0
        %v460 = vmul.f32 %v459, 1.442695
        %v461 = vpow.pop %v460
        %v462 = vsub.f32 %v461, 1.0
        %v463 = vsel %vm458, %v453, %v462
        %464 = vst.msk [vmem:[%s188] sm:$0xff] %vm273, %v463
        %s465 = sand.u32 %s115, 1
        %s466 = scalar_lea.sflag [#allocation3], %s465
        %s467 = sand.u32 %s115, 1
        %s468 = smul.addr %s467, 8
        %s469 = scalar_lea.vmem [#allocation2], %s468
        // Predicated region
        $region37: #{gat_forward.3} parent=35 // pred_check
          %p470 = pneg %p125
        $region38: #{gat_forward.3} parent=35 // pred_check_branch
          %472 = sbr.rel (%p470) target = $region40
        $region39: #{gat_forward.3} parent=35 // pred_region
          %s474 = ssub.s32 128, 128
          %475 = vsyncadd %s466, %s474
          %s476 = smul.addr %s18, 128
          %s477 = scalar_lea.hbm %s4, %s476
          %s479 = sshll.u32 %s469, 4
          %s480 = int_to_ptr.vmem [resolvable:$true] %s479
          %482 = dma.vmem_to_hbm [thread:$0]  %s480, 128, %s477, %s466
        $region40: #{gat_forward.3} parent=35 // pred_fallthru
          _
      $region36: #{gat_forward.3} parent=5 // pred_fallthru
        _
      %p483 = scmp.le.s32.totalorder 2, %s13
      // Predicated region
      $region41: #{gat_forward.3} parent=5 // pred_check
        %p484 = pneg %p483
      $region42: #{gat_forward.3} parent=5 // pred_check_branch
        %486 = sbr.rel (%p484) target = $region44
      $region43: #{gat_forward.3} parent=5 // pred_region
        %s487 = ssub.s32 %s13, 2
        // Predicated region
        $region45: #{gat_forward.3} parent=43 // pred_check
          %p488 = pneg %p131
        $region46: #{gat_forward.3} parent=43 // pred_check_branch
          %490 = sbr.rel (%p488) target = $region48
        $region47: #{gat_forward.3} parent=43 // pred_region
          %s491 = sand.u32 %s116, 1
          %s492 = scalar_lea.sflag [#allocation3], %s491
          %s493 = sand.u32 %s116, 1
          %s494 = smul.addr %s493, 8
          %s495 = scalar_lea.vmem [#allocation2], %s494
          %496 = dma.done %s492, 128
        $region48: #{gat_forward.3} parent=43 // pred_fallthru
          _
      $region44: #{gat_forward.3} parent=5 // pred_fallthru
        _
    $region6: #{gat_forward.3} parent=1 // loop_footer
      %s17 = sadd.s32 1, %s13
    $region7: #{gat_forward.3} parent=1 // loop_footer_branch
      %12 = sbr.rel target = $region3
    $region8: #{gat_forward.3} parent=1 // loop_exit
      _
    %497 = vsyncpa [#allocation3], 1
    %s498 = scalar_lea.sflag [#allocation3], 1
    %499 = vsyncpa %s498, 1

// kernel: gat_forward.2
$region0: #{gat_forward.2}
  #allocation0 [shape = 'u32[]', space=smem, size = 0x4, offset = 0x4, fixed_abs, tag = 'smem constant byte address 0x4 - core index']
  #allocation1 [shape = 'u32[144,128]{1,0:T(1,128)}', space=vmem, size = 0x12000, scoped, tag = 'internal scratch']
  %s0 = inlined_call_operand.vmem [shape: bf16[4,8,16], index: 0, kind: input, shape index: {}]
  %s1 = inlined_call_operand.vmem [shape: f32[8,8], index: 1, kind: input, shape index: {}]
  %s2 = inlined_call_operand.vmem [shape: bf16[16,64], index: 2, kind: input, shape index: {}]
  %s3 = inlined_call_operand.vmem [shape: f32[64,8], index: 3, kind: input, shape index: {}]
  %s4 = inlined_call_operand.vmem [shape: f32[4,8,64], index: 4, kind: output, shape index: {}]
  %s5 = sld [smem:[#allocation0]]
  $region49: #{gat_forward.2} parent=0
    _
  %s7 = ssub.s32 1, %s5
  %s8 = scalar_select 0, %s7, %s5
  loop: start=0, step=1, limit=6
  $region2: #{gat_forward.2} parent=0 // loop_pre_header
    _
  $region3: #{gat_forward.2} parent=0 // loop_header
    %s10 = sphi 0, %s14
    %p11 = scmp.ge.s32.totalorder %s10, 6
    %s20 = sphi 0, %s22
    %s23 = sphi 0, %s20
    %s24 = sphi 0, %s23
    %s40 = sphi 0, %s24
    %s44 = sphi 0, %s44
    %s46 = sphi 0, %s44
    %s47 = sphi 0, %s46
    %s61 = sphi 0, %s47
    %s65 = sphi 0, %s65
    %s67 = sphi 0, %s65
    %s68 = sphi 0, %s67
    %s82 = sphi 0, %s68
    %s86 = sphi 0, %s86
    %s88 = sphi 0, %s86
    %s89 = sphi 0, %s88
    %s103 = sphi 0, %s89
    %s109 = sphi 0, %s111
    %s112 = sphi 0, %s109
    %s113 = sphi 0, %s112
    %s129 = sphi 0, %s113
  $region4: #{gat_forward.2} parent=0 // loop_header_branch
    %13 = sbr.rel (%p11) target = $region8
  $region5: #{gat_forward.2} parent=0 // loop_body
    %s15 = ssub.s32 %s10, 1
    %s16 = ssub.s32 %s10, 2
    %s17 = sadd.s32 %s10, 1
    %s18 = ssub.s32 %s10, %s17
    %p19 = scmp.eq.s32.totalorder %s18, 0
    %s21 = sadd.s32 %s20, 1
    %s22 = scalar_select %p19, %s20, %s21
    %p25 = pneg %p19
    %p26 = scmp.eq.s32.totalorder %s10, 3
    %p27 = por %p25, %p26
    %p28 = scmp.ne.s32.totalorder %s20, %s23
    %p29 = scmp.eq.s32.totalorder %s10, 0
    %p30 = por %p28, %p29
    %p31 = scmp.ne.s32.totalorder %s20, %s23
    %p32 = scmp.eq.s32.totalorder %s15, 3
    %p33 = por %p31, %p32
    %p34 = scmp.ne.s32.totalorder %s23, %s24
    %p35 = scmp.eq.s32.totalorder %s15, 0
    %p36 = por %p34, %p35
    %p37 = scmp.ne.s32.totalorder %s23, %s24
    %p38 = scmp.eq.s32.totalorder %s16, 3
    %p39 = por %p37, %p38
    %p41 = scmp.ne.s32.totalorder %s24, %s40
    %p42 = scmp.eq.s32.totalorder %s16, 0
    %p43 = por %p41, %p42
    %s45 = sadd.s32 %s44, 1
    %p48 = scmp.eq.s32.totalorder %s10, 3
    %p49 = scmp.ne.s32.totalorder %s44, %s46
    %p50 = scmp.eq.s32.totalorder %s10, 0
    %p51 = por %p49, %p50
    %p52 = scmp.ne.s32.totalorder %s44, %s46
    %p53 = scmp.eq.s32.totalorder %s15, 3
    %p54 = por %p52, %p53
    %p55 = scmp.ne.s32.totalorder %s46, %s47
    %p56 = scmp.eq.s32.totalorder %s15, 0
    %p57 = por %p55, %p56
    %p58 = scmp.ne.s32.totalorder %s46, %s47
    %p59 = scmp.eq.s32.totalorder %s16, 3
    %p60 = por %p58, %p59
    %p62 = scmp.ne.s32.totalorder %s47, %s61
    %p63 = scmp.eq.s32.totalorder %s16, 0
    %p64 = por %p62, %p63
    %s66 = sadd.s32 %s65, 1
    %p69 = scmp.eq.s32.totalorder %s10, 3
    %p70 = scmp.ne.s32.totalorder %s65, %s67
    %p71 = scmp.eq.s32.totalorder %s10, 0
    %p72 = por %p70, %p71
    %p73 = scmp.ne.s32.totalorder %s65, %s67
    %p74 = scmp.eq.s32.totalorder %s15, 3
    %p75 = por %p73, %p74
    %p76 = scmp.ne.s32.totalorder %s67, %s68
    %p77 = scmp.eq.s32.totalorder %s15, 0
    %p78 = por %p76, %p77
    %p79 = scmp.ne.s32.totalorder %s67, %s68
    %p80 = scmp.eq.s32.totalorder %s16, 3
    %p81 = por %p79, %p80
    %p83 = scmp.ne.s32.totalorder %s68, %s82
    %p84 = scmp.eq.s32.totalorder %s16, 0
    %p85 = por %p83, %p84
    %s87 = sadd.s32 %s86, 1
    %p90 = scmp.eq.s32.totalorder %s10, 3
    %p91 = scmp.ne.s32.totalorder %s86, %s88
    %p92 = scmp.eq.s32.totalorder %s10, 0
    %p93 = por %p91, %p92
    %p94 = scmp.ne.s32.totalorder %s86, %s88
    %p95 = scmp.eq.s32.totalorder %s15, 3
    %p96 = por %p94, %p95
    %p97 = scmp.ne.s32.totalorder %s88, %s89
    %p98 = scmp.eq.s32.totalorder %s15, 0
    %p99 = por %p97, %p98
    %p100 = scmp.ne.s32.totalorder %s88, %s89
    %p101 = scmp.eq.s32.totalorder %s16, 3
    %p102 = por %p100, %p101
    %p104 = scmp.ne.s32.totalorder %s89, %s103
    %p105 = scmp.eq.s32.totalorder %s16, 0
    %p106 = por %p104, %p105
    %s107 = ssub.s32 %s10, %s17
    %p108 = scmp.eq.s32.totalorder %s107, 0
    %s110 = sadd.s32 %s109, 1
    %s111 = scalar_select %p108, %s109, %s110
    %p114 = pneg %p108
    %p115 = scmp.eq.s32.totalorder %s10, 3
    %p116 = por %p114, %p115
    %p117 = scmp.ne.s32.totalorder %s109, %s112
    %p118 = scmp.eq.s32.totalorder %s10, 0
    %p119 = por %p117, %p118
    %p120 = scmp.ne.s32.totalorder %s109, %s112
    %p121 = scmp.eq.s32.totalorder %s15, 3
    %p122 = por %p120, %p121
    %p123 = scmp.ne.s32.totalorder %s112, %s113
    %p124 = scmp.eq.s32.totalorder %s15, 0
    %p125 = por %p123, %p124
    %p126 = scmp.ne.s32.totalorder %s112, %s113
    %p127 = scmp.eq.s32.totalorder %s16, 3
    %p128 = por %p126, %p127
    %p130 = scmp.ne.s32.totalorder %s113, %s129
    %p131 = scmp.eq.s32.totalorder %s16, 0
    %p132 = por %p130, %p131
    %p133 = scmp.le.s32.totalorder 1, %s10
    %p134 = scmp.lt.s32.totalorder %s10, 5
    %p135 = pnand %p133, %p134
    %p136 = pneg %p135
    // Predicated region
    $region9: #{gat_forward.2} parent=5 // pred_check
      _
    $region10: #{gat_forward.2} parent=5 // pred_check_branch
      %138 = sbr.rel (%p135) target = $region12
    $region11: #{gat_forward.2} parent=5 // pred_region
      %s139 = ssub.s32 %s10, 1
      // Predicated region
      $region13: #{gat_forward.2} parent=11 // pred_check
        %p140 = pneg %p57
      $region14: #{gat_forward.2} parent=11 // pred_check_branch
        %142 = sbr.rel (%p140) target = $region16
      $region15: #{gat_forward.2} parent=11 // pred_region
        _
      $region16: #{gat_forward.2} parent=11 // pred_fallthru
        _
      // Predicated region
      $region17: #{gat_forward.2} parent=11 // pred_check
        %p143 = pneg %p78
      $region18: #{gat_forward.2} parent=11 // pred_check_branch
        %145 = sbr.rel (%p143) target = $region20
      $region19: #{gat_forward.2} parent=11 // pred_region
        _
      $region20: #{gat_forward.2} parent=11 // pred_fallthru
        _
      // Predicated region
      $region21: #{gat_forward.2} parent=11 // pred_check
        %p146 = pneg %p99
      $region22: #{gat_forward.2} parent=11 // pred_check_branch
        %148 = sbr.rel (%p146) target = $region24
      $region23: #{gat_forward.2} parent=11 // pred_region
        _
      $region24: #{gat_forward.2} parent=11 // pred_fallthru
        _
    $region12: #{gat_forward.2} parent=5 // pred_fallthru
      _
    %p149 = scmp.lt.s32.totalorder %s10, 4
    // Predicated region
    $region25: #{gat_forward.2} parent=5 // pred_check
      %p150 = pneg %p149
    $region26: #{gat_forward.2} parent=5 // pred_check_branch
      %152 = sbr.rel (%p150) target = $region28
    $region27: #{gat_forward.2} parent=5 // pred_region
      // Predicated region
      $region29: #{gat_forward.2} parent=27 // pred_check
        %p153 = pneg %p30
      $region30: #{gat_forward.2} parent=27 // pred_check_branch
        %155 = sbr.rel (%p153) target = $region32
      $region31: #{gat_forward.2} parent=27 // pred_region
        %p156 = scmp.lt.s32.totalorder %s10, 3
        %s157 = scalar_select %p156, %s10, 3
        %s158 = smul.addr %s157, 4
        %s159 = scalar_lea.vmem %s0, %s158
      $region32: #{gat_forward.2} parent=27 // pred_fallthru
        _
    $region28: #{gat_forward.2} parent=5 // pred_fallthru
      _
    %p160 = scmp.le.s32.totalorder 1, %s10
    %p161 = scmp.lt.s32.totalorder %s10, 5
    %p162 = pnand %p160, %p161
    %p163 = pneg %p162
    // Predicated region
    $region33: #{gat_forward.2} parent=5 // pred_check
      _
    $region34: #{gat_forward.2} parent=5 // pred_check_branch
      %165 = sbr.rel (%p162) target = $region36
    $region35: #{gat_forward.2} parent=5 // pred_region
      %s166 = ssub.s32 %s10, 1
      %p167 = scmp.lt.s32.totalorder %s15, 3
      %s168 = scalar_select %p167, %s15, 3
      %s169 = smul.addr %s168, 4
      %s170 = scalar_lea.vmem %s0, %s169
      %p171 = pneg %p36
      %p172 = pneg %p33
      %p173 = pneg %p57
      %p174 = pneg %p54
      %p175 = pneg %p78
      %p176 = pneg %p75
      %p177 = pneg %p99
      %p178 = pneg %p96
      %p179 = pneg %p125
      %p180 = pneg %p122
      %p181 = scmp.lt.s32.totalorder %s15, 3
      %s182 = scalar_select %p181, %s15, 3
      %s183 = smul.addr %s182, 8
      %s184 = scalar_lea.vmem %s4, %s183
      %p185 = scmp.lt.s32.totalorder %s15, 3
      %s186 = scalar_select %p185, %s15, 3
      %s187 = smul.addr %s186, 4
      %s188 = scalar_lea.vmem %s0, %s187
      %p189 = scmp.lt.s32.totalorder %s15, 3
      %s190 = scalar_select %p189, %s15, 3
      %s191 = smul.addr %s190, 8
      %s192 = scalar_lea.vmem %s4, %s191
      %v194 = vld [vmem:[%s188] sm:$0xf]
      %v195 = vld [vmem:[%s2] sm:$0xf]
      %v196 = vld [vmem:[%s2 + $0x4] sm:$0xf]
      %v199 = vunpack.c.l.b16 %v195
      %v200 = vunpack.c.l.b16 %v196
      %v201 = vpack.c.b16 %v200, %v199
      %vm203 = vcmask 130048
      %v205 = vsel %vm203, %v194, 0
      %207 = vmatprep.subr.bf16.mxu0 0
      %208 = vmatpush1.bf16.msra.mxu0 %v201
      %209 = vmatprep.subr.bf16.mxu0 0
      %210 = vmatpush1.bf16.msra.mxu0 0
      %211 = vmatprep.subr.bf16.mxu0 0
      %212 = vmatpush1.bf16.msra.mxu0 0
      %213 = vmatprep.subr.bf16.mxu0 0
      %214 = vmatpush1.bf16.msra.mxu0 0
      %215 = vmatprep.subr.bf16.mxu0 0
      %216 = vmatpush1.bf16.msra.mxu0 0
      %217 = vmatprep.subr.bf16.mxu0 0
      %218 = vmatpush1.bf16.msra.mxu0 0
      %219 = vmatprep.subr.bf16.mxu0 0
      %220 = vmatpush1.bf16.msra.mxu0 0
      %221 = vmatprep.subr.bf16.mxu0 0
      %222 = vmatpush1.bf16.msra.mxu0 0
      %223 = vmatprep.subr.bf16.mxu0 0
      %224 = vmatpush1.bf16.msra.mxu0 0
      %225 = vmatprep.subr.bf16.mxu0 0
      %226 = vmatpush1.bf16.msra.mxu0 0
      %227 = vmatprep.subr.bf16.mxu0 0
      %228 = vmatpush1.bf16.msra.mxu0 0
      %229 = vmatprep.subr.bf16.mxu0 0
      %230 = vmatpush1.bf16.msra.mxu0 0
      %231 = vmatprep.subr.bf16.mxu0 0
      %232 = vmatpush1.bf16.msra.mxu0 0
      %233 = vmatprep.subr.bf16.mxu0 0
      %234 = vmatpush1.bf16.msra.mxu0 0
      %235 = vmatprep.subr.bf16.mxu0 0
      %236 = vmatpush1.bf16.msra.mxu0 0
      %237 = vmatprep.subr.bf16.mxu0 0
      %238 = vmatpush1.bf16.msra.mxu0 0
      %239 = vmatprep.mubr.bf16.mxu0 0
      %240 = vmatmul.mubr.bf16.gmra.mrb[0].mxu0 %v205
      %v241 = vpop.f32.mrb[0].mxu0
      %v242 = vadd.f32 0.0, %v241
      %v243 = vpop.f32.mrb[0].mxu0
      %v244 = vpop.f32.mrb[0].mxu0
      %v245 = vpop.f32.mrb[0].mxu0
      %246 = vdwg.mxu0
      %v247 = vld [vmem:[%s3] sm:$0xff]
      %v248 = vld [vmem:[%s3 + $0x8] sm:$0xff]
      %v249 = vld [vmem:[%s3 + $0x10] sm:$0xff]
      %v250 = vld [vmem:[%s3 + $0x18] sm:$0xff]
      %v251 = vld [vmem:[%s3 + $0x20] sm:$0xff]
      %v252 = vld [vmem:[%s3 + $0x28] sm:$0xff]
      %v253 = vld [vmem:[%s3 + $0x30] sm:$0xff]
      %v254 = vld [vmem:[%s3 + $0x38] sm:$0xff]
      %vm255 = vcmask 523264
      %v257 = vsel %vm255, %v242, 0
      %259 = vmatprep.subr.mxu0 0.0
      %260 = vmatpush1.msra.mxu0 %v247
      %261 = vmatprep.subr.mxu0 0.0
      %262 = vmatpush1.msra.mxu0 %v248
      %263 = vmatprep.subr.mxu0 0.0
      %264 = vmatpush1.msra.mxu0 %v249
      %265 = vmatprep.subr.mxu0 0.0
      %266 = vmatpush1.msra.mxu0 %v250
      %267 = vmatprep.subr.mxu0 0.0
      %268 = vmatpush1.msra.mxu0 %v251
      %269 = vmatprep.subr.mxu0 0.0
      %270 = vmatpush1.msra.mxu0 %v252
      %271 = vmatprep.subr.mxu0 0.0
      %272 = vmatpush1.msra.mxu0 %v253
      %273 = vmatprep.subr.mxu0 0.0
      %274 = vmatpush1.msra.mxu0 %v254
      %275 = vmatprep.subr.mxu0 0.0
      %276 = vmatpush1.msra.mxu0 0.0
      %277 = vmatprep.subr.mxu0 0.0
      %278 = vmatpush1.msra.mxu0 0.0
      %279 = vmatprep.subr.mxu0 0.0
      %280 = vmatpush1.msra.mxu0 0.0
      %281 = vmatprep.subr.mxu0 0.0
      %282 = vmatpush1.msra.mxu0 0.0
      %283 = vmatprep.subr.mxu0 0.0
      %284 = vmatpush1.msra.mxu0 0.0
      %285 = vmatprep.subr.mxu0 0.0
      %286 = vmatpush1.msra.mxu0 0.0
      %287 = vmatprep.subr.mxu0 0.0
      %288 = vmatpush1.msra.mxu0 0.0
      %289 = vmatprep.subr.mxu0 0.0
      %290 = vmatpush1.msra.mxu0 0.0
      %291 = vmatprep.subr.mxu0 0.0
      %292 = vmatpush1.msra.mxu0 0.0
      %293 = vmatprep.subr.mxu0 0.0
      %294 = vmatpush1.msra.mxu0 0.0
      %295 = vmatprep.subr.mxu0 0.0
      %296 = vmatpush1.msra.mxu0 0.0
      %297 = vmatprep.subr.mxu0 0.0
      %298 = vmatpush1.msra.mxu0 0.0
      %299 = vmatprep.subr.mxu0 0.0
      %300 = vmatpush1.msra.mxu0 0.0
      %301 = vmatprep.subr.mxu0 0.0
      %302 = vmatpush1.msra.mxu0 0.0
      %303 = vmatprep.subr.mxu0 0.0
      %304 = vmatpush1.msra.mxu0 0.0
      %305 = vmatprep.subr.mxu0 0.0
      %306 = vmatpush1.msra.mxu0 0.0
      %307 = vmatprep.subr.mxu0 0.0
      %308 = vmatpush1.msra.mxu0 0.0
      %309 = vmatprep.subr.mxu0 0.0
      %310 = vmatpush1.msra.mxu0 0.0
      %311 = vmatprep.subr.mxu0 0.0
      %312 = vmatpush1.msra.mxu0 0.0
      %313 = vmatprep.subr.mxu0 0.0
      %314 = vmatpush1.msra.mxu0 0.0
      %315 = vmatprep.subr.mxu0 0.0
      %316 = vmatpush1.msra.mxu0 0.0
      %317 = vmatprep.subr.mxu0 0.0
      %318 = vmatpush1.msra.mxu0 0.0
      %319 = vmatprep.subr.mxu0 0.0
      %320 = vmatpush1.msra.mxu0 0.0
      %321 = vmatprep.subr.mxu0 0.0
      %322 = vmatpush1.msra.mxu0 0.0
      %323 = vmatprep.mubr.f32.mxu0 0.0
      %324 = vmatmul.mubr.f32.gmra.mrb[0].mxu0 %v257
      %v325 = vpop.f32.mrb[0].mxu0
      %v326 = vadd.f32 0.0, %v325
      %v327 = vpop.f32.mrb[0].mxu0
      %328 = vdwg.mxu0
      %330 = vrot.lane.b32.xlu0 %v326, 124
      %v331 = vpop.permute.xlu0 %330
      %333 = vxpose.xlu0.b32.start [1/16] %v331, 128
      %334 = vxpose.xlu0.b32.cont [2/16] 0.0, 128
      %335 = vxpose.xlu0.b32.cont [3/16] 0.0, 128
      %336 = vxpose.xlu0.b32.cont [4/16] 0.0, 128
      %337 = vxpose.xlu0.b32.cont [5/16] 0.0, 128
      %338 = vxpose.xlu0.b32.cont [6/16] 0.0, 128
      %339 = vxpose.xlu0.b32.cont [7/16] 0.0, 128
      %340 = vxpose.xlu0.b32.cont [8/16] 0.0, 128
      %341 = vxpose.xlu0.b32.cont [9/16] 0.0, 128
      %342 = vxpose.xlu0.b32.cont [10/16] 0.0, 128
      %343 = vxpose.xlu0.b32.cont [11/16] 0.0, 128
      %344 = vxpose.xlu0.b32.cont [12/16] 0.0, 128
      %345 = vxpose.xlu0.b32.cont [13/16] 0.0, 128
      %346 = vxpose.xlu0.b32.cont [14/16] 0.0, 128
      %347 = vxpose.xlu0.b32.cont [15/16] 0.0, 128
      %348 = vxpose.xlu0.b32.end [16/16] 0.0, 128
      %v349 = vpop.trf.xlu0
      %v350 = vpop.trf.xlu0
      %v351 = vpop.trf.xlu0
      %v352 = vpop.trf.xlu0
      %v353 = vpop.trf.xlu0
      %v354 = vpop.trf.xlu0
      %v355 = vpop.trf.xlu0
      %v356 = vpop.trf.xlu0
      %v357 = vpop.trf.xlu0
      %v358 = vpop.trf.xlu0
      %v359 = vpop.trf.xlu0
      %v360 = vpop.trf.xlu0
      %v361 = vpop.trf.xlu0
      %v362 = vpop.trf.xlu0
      %v363 = vpop.trf.xlu0
      %v364 = vpop.trf.xlu0
      %v365 = vld [vmem:[%s1] sm:$0xff]
      %v366 = vpack.c.bf16 %v242, %v242
      %367 = vset.pattern.permute.xlu0 0
      %368 = vperm.xlu0 %367, %v326
      %v369 = vpop.permute.xlu0 %368
      %v371 = vlaneseq
      %v372 = vshrl.u32 %v371, 7
      %v373 = vsub.s32 0, %v372
      %v374 = vrot.slane %v349, %v373
      %v375 = vadd.f32 %v369, %v374
      %vm376 = vcmp.gt.f32.partialorder %v375, 0.0
      %v377 = vmul.f32 %v375, 0.1
      %v378 = vsel %vm376, %v375, %v377
      %v379 = vadd.f32 %v378, %v365
      %vm380 = vcmask 64512
      %v381 = vsel %vm380, %v379, -inf
      %382 = vmax.xlane.f32.xlu0 %v381
      %v383 = vpop.xlane.xlu0 %382
      %v384 = vsub.f32 %v379, %v383
      %v385 = vmul.f32 %v384, 1.442695
      %v386 = vpow.pop %v385
      %v387 = vsel %vm380, %v386, 0.0
      %388 = vadd.xlane.f32.xlu0 %v387
      %v389 = vpop.xlane.xlu0 %388
      %v390 = vrcp.pop %v389
      %v391 = vmul.f32 %v386, %v390
      %v392 = vpack.c.bf16 %v391, %v391
      %v394 = vsel %vm380, %v392, 0
      %vm396 = vcmask 1043456
      %v398 = vsel %vm396, %v366, 0
      %400 = vmatprep.subr.bf16.mxu0 0
      %401 = vmatpush1.bf16.msra.mxu0 %v398
      %402 = vmatprep.subr.bf16.mxu0 0
      %403 = vmatpush1.bf16.msra.mxu0 0
      %404 = vmatprep.subr.bf16.mxu0 0
      %405 = vmatpush1.bf16.msra.mxu0 0
      %406 = vmatprep.subr.bf16.mxu0 0
      %407 = vmatpush1.bf16.msra.mxu0 0
      %408 = vmatprep.subr.bf16.mxu0 0
      %409 = vmatpush1.bf16.msra.mxu0 0
      %410 = vmatprep.subr.bf16.mxu0 0
      %411 = vmatpush1.bf16.msra.mxu0 0
      %412 = vmatprep.subr.bf16.mxu0 0
      %413 = vmatpush1.bf16.msra.mxu0 0
      %414 = vmatprep.subr.bf16.mxu0 0
      %415 = vmatpush1.bf16.msra.mxu0 0
      %416 = vmatprep.subr.bf16.mxu0 0
      %417 = vmatpush1.bf16.msra.mxu0 0
      %418 = vmatprep.subr.bf16.mxu0 0
      %419 = vmatpush1.bf16.msra.mxu0 0
      %420 = vmatprep.subr.bf16.mxu0 0
      %421 = vmatpush1.bf16.msra.mxu0 0
      %422 = vmatprep.subr.bf16.mxu0 0
      %423 = vmatpush1.bf16.msra.mxu0 0
      %424 = vmatprep.subr.bf16.mxu0 0
      %425 = vmatpush1.bf16.msra.mxu0 0
      %426 = vmatprep.subr.bf16.mxu0 0
      %427 = vmatpush1.bf16.msra.mxu0 0
      %428 = vmatprep.subr.bf16.mxu0 0
      %429 = vmatpush1.bf16.msra.mxu0 0
      %430 = vmatprep.subr.bf16.mxu0 0
      %431 = vmatpush1.bf16.msra.mxu0 0
      %432 = vmatprep.mubr.bf16.mxu0 0
      %433 = vmatmul.mubr.bf16.gmra.mrb[0].mxu0 %v394
      %v434 = vpop.f32.mrb[0].mxu0
      %v435 = vadd.f32 0.0, %v434
      %v436 = vpop.f32.mrb[0].mxu0
      %v437 = vpop.f32.mrb[0].mxu0
      %v438 = vpop.f32.mrb[0].mxu0
      %439 = vdwg.mxu0
      %vm440 = vcmp.gt.f32.partialorder %v435, 0.0
      %v441 = vmin.f32 %v435, 0.0
      %v442 = vmul.f32 %v441, 1.442695
      %v443 = vpow.pop %v442
      %v444 = vsub.f32 %v443, 1.0
      %v445 = vsel %vm440, %v435, %v444
      %446 = vset.pattern.permute.xlu0 1
      %447 = vperm.xlu0 %446, %v326
      %v448 = vpop.permute.xlu0 %447
      %v450 = vlaneseq
      %v451 = vshrl.u32 %v450, 7
      %v452 = vsub.s32 1, %v451
      %v453 = vrot.slane %v349, %v452
      %v454 = vadd.f32 %v448, %v453
      %vm455 = vcmp.gt.f32.partialorder %v454, 0.0
      %v456 = vmul.f32 %v454, 0.1
      %v457 = vsel %vm455, %v454, %v456
      %v458 = vadd.f32 %v457, %v365
      %v459 = vsel %vm380, %v458, -inf
      %460 = vmax.xlane.f32.xlu0 %v459
      %v461 = vpop.xlane.xlu0 %460
      %v462 = vsub.f32 %v458, %v461
      %v463 = vmul.f32 %v462, 1.442695
      %v464 = vpow.pop %v463
      %v465 = vsel %vm380, %v464, 0.0
      %466 = vadd.xlane.f32.xlu0 %v465
      %v467 = vpop.xlane.xlu0 %466
      %v468 = vrcp.pop %v467
      %v469 = vmul.f32 %v464, %v468
      %v470 = vpack.c.bf16 %v469, %v469
      %472 = vrot.lane.b32.xlu0 %v366, 112
      %v473 = vpop.permute.xlu0 %472
      %v475 = vsel %vm380, %v470, 0
      %v478 = vsel %vm396, %v473, 0
      %480 = vmatprep.subr.bf16.mxu0 0
      %481 = vmatpush1.bf16.msra.mxu0 %v478
      %482 = vmatprep.subr.bf16.mxu0 0
      %483 = vmatpush1.bf16.msra.mxu0 0
      %484 = vmatprep.subr.bf16.mxu0 0
      %485 = vmatpush1.bf16.msra.mxu0 0
      %486 = vmatprep.subr.bf16.mxu0 0
      %487 = vmatpush1.bf16.msra.mxu0 0
      %488 = vmatprep.subr.bf16.mxu0 0
      %489 = vmatpush1.bf16.msra.mxu0 0
      %490 = vmatprep.subr.bf16.mxu0 0
      %491 = vmatpush1.bf16.msra.mxu0 0
      %492 = vmatprep.subr.bf16.mxu0 0
      %493 = vmatpush1.bf16.msra.mxu0 0
      %494 = vmatprep.subr.bf16.mxu0 0
      %495 = vmatpush1.bf16.msra.mxu0 0
      %496 = vmatprep.subr.bf16.mxu0 0
      %497 = vmatpush1.bf16.msra.mxu0 0
      %498 = vmatprep.subr.bf16.mxu0 0
      %499 = vmatpush1.bf16.msra.mxu0 0
      %500 = vmatprep.subr.bf16.mxu0 0
      %501 = vmatpush1.bf16.msra.mxu0 0
      %502 = vmatprep.subr.bf16.mxu0 0
      %503 = vmatpush1.bf16.msra.mxu0 0
      %504 = vmatprep.subr.bf16.mxu0 0
      %505 = vmatpush1.bf16.msra.mxu0 0
      %506 = vmatprep.subr.bf16.mxu0 0
      %507 = vmatpush1.bf16.msra.mxu0 0
      %508 = vmatprep.subr.bf16.mxu0 0
      %509 = vmatpush1.bf16.msra.mxu0 0
      %510 = vmatprep.subr.bf16.mxu0 0
      %511 = vmatpush1.bf16.msra.mxu0 0
      %512 = vmatprep.mubr.bf16.mxu0 0
      %513 = vmatmul.mubr.bf16.gmra.mrb[0].mxu0 %v475
      %v514 = vpop.f32.mrb[0].mxu0
      %v515 = vadd.f32 0.0, %v514
      %v516 = vpop.f32.mrb[0].mxu0
      %v517 = vpop.f32.mrb[0].mxu0
      %v518 = vpop.f32.mrb[0].mxu0
      %519 = vdwg.mxu0
      %vm520 = vcmp.gt.f32.partialorder %v515, 0.0
      %v521 = vmin.f32 %v515, 0.0
      %v522 = vmul.f32 %v521, 1.442695
      %v523 = vpow.pop %v522
      %v524 = vsub.f32 %v523, 1.0
      %v525 = vsel %vm520, %v515, %v524
      %526 = vset.pattern.permute.xlu0 2
      %527 = vperm.xlu0 %526, %v326
      %v528 = vpop.permute.xlu0 %527
      %v530 = vlaneseq
      %v531 = vshrl.u32 %v530, 7
      %v532 = vsub.s32 2, %v531
      %v533 = vrot.slane %v349, %v532
      %v534 = vadd.f32 %v528, %v533
      %vm535 = vcmp.gt.f32.partialorder %v534, 0.0
      %v536 = vmul.f32 %v534, 0.1
      %v537 = vsel %vm535, %v534, %v536
      %v538 = vadd.f32 %v537, %v365
      %v539 = vsel %vm380, %v538, -inf
      %540 = vmax.xlane.f32.xlu0 %v539
      %v541 = vpop.xlane.xlu0 %540
      %v542 = vsub.f32 %v538, %v541
      %v543 = vmul.f32 %v542, 1.442695
      %v544 = vpow.pop %v543
      %v545 = vsel %vm380, %v544, 0.0
      %546 = vadd.xlane.f32.xlu0 %v545
      %v547 = vpop.xlane.xlu0 %546
      %v548 = vrcp.pop %v547
      %v549 = vmul.f32 %v544, %v548
      %v550 = vpack.c.bf16 %v549, %v549
      %551 = vrot.lane.b32.xlu0 %v366, 96
      %v552 = vpop.permute.xlu0 %551
      %v554 = vsel %vm380, %v550, 0
      %v557 = vsel %vm396, %v552, 0
      %559 = vmatprep.subr.bf16.mxu0 0
      %560 = vmatpush1.bf16.msra.mxu0 %v557
      %561 = vmatprep.subr.bf16.mxu0 0
      %562 = vmatpush1.bf16.msra.mxu0 0
      %563 = vmatprep.subr.bf16.mxu0 0
      %564 = vmatpush1.bf16.msra.mxu0 0
      %565 = vmatprep.subr.bf16.mxu0 0
      %566 = vmatpush1.bf16.msra.mxu0 0
      %567 = vmatprep.subr.bf16.mxu0 0
      %568 = vmatpush1.bf16.msra.mxu0 0
      %569 = vmatprep.subr.bf16.mxu0 0
      %570 = vmatpush1.bf16.msra.mxu0 0
      %571 = vmatprep.subr.bf16.mxu0 0
      %572 = vmatpush1.bf16.msra.mxu0 0
      %573 = vmatprep.subr.bf16.mxu0 0
      %574 = vmatpush1.bf16.msra.mxu0 0
      %575 = vmatprep.subr.bf16.mxu0 0
      %576 = vmatpush1.bf16.msra.mxu0 0
      %577 = vmatprep.subr.bf16.mxu0 0
      %578 = vmatpush1.bf16.msra.mxu0 0
      %579 = vmatprep.subr.bf16.mxu0 0
      %580 = vmatpush1.bf16.msra.mxu0 0
      %581 = vmatprep.subr.bf16.mxu0 0
      %582 = vmatpush1.bf16.msra.mxu0 0
      %583 = vmatprep.subr.bf16.mxu0 0
      %584 = vmatpush1.bf16.msra.mxu0 0
      %585 = vmatprep.subr.bf16.mxu0 0
      %586 = vmatpush1.bf16.msra.mxu0 0
      %587 = vmatprep.subr.bf16.mxu0 0
      %588 = vmatpush1.bf16.msra.mxu0 0
      %589 = vmatprep.subr.bf16.mxu0 0
      %590 = vmatpush1.bf16.msra.mxu0 0
      %591 = vmatprep.mubr.bf16.mxu0 0
      %592 = vmatmul.mubr.bf16.gmra.mrb[0].mxu0 %v554
      %v593 = vpop.f32.mrb[0].mxu0
      %v594 = vadd.f32 0.0, %v593
      %v595 = vpop.f32.mrb[0].mxu0
      %v596 = vpop.f32.mrb[0].mxu0
      %v597 = vpop.f32.mrb[0].mxu0
      %598 = vdwg.mxu0
      %vm599 = vcmp.gt.f32.partialorder %v594, 0.0
      %v600 = vmin.f32 %v594, 0.0
      %v601 = vmul.f32 %v600, 1.442695
      %v602 = vpow.pop %v601
      %v603 = vsub.f32 %v602, 1.0
      %v604 = vsel %vm599, %v594, %v603
      %605 = vset.pattern.permute.xlu0 3
      %606 = vperm.xlu0 %605, %v326
      %v607 = vpop.permute.xlu0 %606
      %v609 = vlaneseq
      %v610 = vshrl.u32 %v609, 7
      %v611 = vsub.s32 3, %v610
      %v612 = vrot.slane %v349, %v611
      %v613 = vadd.f32 %v607, %v612
      %vm614 = vcmp.gt.f32.partialorder %v613, 0.0
      %v615 = vmul.f32 %v613, 0.1
      %v616 = vsel %vm614, %v613, %v615
      %v617 = vadd.f32 %v616, %v365
      %v618 = vsel %vm380, %v617, -inf
      %619 = vmax.xlane.f32.xlu0 %v618
      %v620 = vpop.xlane.xlu0 %619
      %v621 = vsub.f32 %v617, %v620
      %v622 = vmul.f32 %v621, 1.442695
      %v623 = vpow.pop %v622
      %v624 = vsel %vm380, %v623, 0.0
      %625 = vadd.xlane.f32.xlu0 %v624
      %v626 = vpop.xlane.xlu0 %625
      %v627 = vrcp.pop %v626
      %v628 = vmul.f32 %v623, %v627
      %v629 = vpack.c.bf16 %v628, %v628
      %630 = vrot.lane.b32.xlu0 %v366, 80
      %v631 = vpop.permute.xlu0 %630
      %v633 = vsel %vm380, %v629, 0
      %v636 = vsel %vm396, %v631, 0
      %638 = vmatprep.subr.bf16.mxu0 0
      %639 = vmatpush1.bf16.msra.mxu0 %v636
      %640 = vmatprep.subr.bf16.mxu0 0
      %641 = vmatpush1.bf16.msra.mxu0 0
      %642 = vmatprep.subr.bf16.mxu0 0
      %643 = vmatpush1.bf16.msra.mxu0 0
      %644 = vmatprep.subr.bf16.mxu0 0
      %645 = vmatpush1.bf16.msra.mxu0 0
      %646 = vmatprep.subr.bf16.mxu0 0
      %647 = vmatpush1.bf16.msra.mxu0 0
      %648 = vmatprep.subr.bf16.mxu0 0
      %649 = vmatpush1.bf16.msra.mxu0 0
      %650 = vmatprep.subr.bf16.mxu0 0
      %651 = vmatpush1.bf16.msra.mxu0 0
      %652 = vmatprep.subr.bf16.mxu0 0
      %653 = vmatpush1.bf16.msra.mxu0 0
      %654 = vmatprep.subr.bf16.mxu0 0
      %655 = vmatpush1.bf16.msra.mxu0 0
      %656 = vmatprep.subr.bf16.mxu0 0
      %657 = vmatpush1.bf16.msra.mxu0 0
      %658 = vmatprep.subr.bf16.mxu0 0
      %659 = vmatpush1.bf16.msra.mxu0 0
      %660 = vmatprep.subr.bf16.mxu0 0
      %661 = vmatpush1.bf16.msra.mxu0 0
      %662 = vmatprep.subr.bf16.mxu0 0
      %663 = vmatpush1.bf16.msra.mxu0 0
      %664 = vmatprep.subr.bf16.mxu0 0
      %665 = vmatpush1.bf16.msra.mxu0 0
      %666 = vmatprep.subr.bf16.mxu0 0
      %667 = vmatpush1.bf16.msra.mxu0 0
      %668 = vmatprep.subr.bf16.mxu0 0
      %669 = vmatpush1.bf16.msra.mxu0 0
      %670 = vmatprep.mubr.bf16.mxu0 0
      %671 = vmatmul.mubr.bf16.gmra.mrb[0].mxu0 %v633
      %v672 = vpop.f32.mrb[0].mxu0
      %v673 = vadd.f32 0.0, %v672
      %v674 = vpop.f32.mrb[0].mxu0
      %v675 = vpop.f32.mrb[0].mxu0
      %v676 = vpop.f32.mrb[0].mxu0
      %677 = vdwg.mxu0
      %vm678 = vcmp.gt.f32.partialorder %v673, 0.0
      %v679 = vmin.f32 %v673, 0.0
      %v680 = vmul.f32 %v679, 1.442695
      %v681 = vpow.pop %v680
      %v682 = vsub.f32 %v681, 1.0
      %v683 = vsel %vm678, %v673, %v682
      %685 = vrot.lane.b32.xlu0 %v525, 16
      %v686 = vpop.permute.xlu0 %685
      %689 = vrot.lane.b32.xlu0 %v604, 32
      %v690 = vpop.permute.xlu0 %689
      %693 = vrot.lane.b32.xlu0 %v683, 48
      %v694 = vpop.permute.xlu0 %693
      %v696 = vsel %vm203, %v445, %v686
      %vm697 = vcmask 261120
      %v698 = vsel %vm697, %v696, %v690
      %vm699 = vcmask 392192
      %v700 = vsel %vm699, %v698, %v694
      %701 = vst.msk [vmem:[%s192] sm:$0xff] %vm255, %v700
      %p702 = scmp.lt.s32.totalorder %s15, 3
      %s703 = scalar_select %p702, %s15, 3
      %s704 = smul.addr %s703, 8
      %s705 = scalar_lea.vmem %s4, %s704
      // Predicated region
      $region37: #{gat_forward.2} parent=35 // pred_check
        %p706 = pneg %p122
      $region38: #{gat_forward.2} parent=35 // pred_check_branch
        %708 = sbr.rel (%p706) target = $region40
      $region39: #{gat_forward.2} parent=35 // pred_region
        _
      $region40: #{gat_forward.2} parent=35 // pred_fallthru
        _
    $region36: #{gat_forward.2} parent=5 // pred_fallthru
      _
    %p709 = scmp.le.s32.totalorder 2, %s10
    // Predicated region
    $region41: #{gat_forward.2} parent=5 // pred_check
      %p710 = pneg %p709
    $region42: #{gat_forward.2} parent=5 // pred_check_branch
      %712 = sbr.rel (%p710) target = $region44
    $region43: #{gat_forward.2} parent=5 // pred_region
      %s713 = ssub.s32 %s10, 2
      // Predicated region
      $region45: #{gat_forward.2} parent=43 // pred_check
        %p714 = pneg %p128
      $region46: #{gat_forward.2} parent=43 // pred_check_branch
        %716 = sbr.rel (%p714) target = $region48
      $region47: #{gat_forward.2} parent=43 // pred_region
        %p717 = scmp.lt.s32.totalorder %s16, 3
        %s718 = scalar_select %p717, %s16, 3
        %s719 = smul.addr %s718, 8
        %s720 = scalar_lea.vmem %s4, %s719
      $region48: #{gat_forward.2} parent=43 // pred_fallthru
        _
    $region44: #{gat_forward.2} parent=5 // pred_fallthru
      _
  $region6: #{gat_forward.2} parent=0 // loop_footer
    %s14 = sadd.s32 1, %s10
  $region7: #{gat_forward.2} parent=0 // loop_footer_branch
    %9 = sbr.rel target = $region3
  $region8: #{gat_forward.2} parent=0 // loop_exit
    _

</llo_original>
